<compile_context>
chip_gen: v5e
topology: v5e:2x2
jax: 0.10.0
libtpu: 0.0.40
codegen_flags: <defaults>
</compile_context>

<pallas_src>
import jax
import jax.numpy as jnp
from jax.experimental import pallas as pl
from jax.experimental.pallas import tpu as pltpu

# ---- model config (dataset='nus-wide-object', shrinkge_type='soft thresh') ----
VIEWDIMS = [64, 144, 73, 128, 225, 500]
ACCU_DIMS = [64, 208, 281, 409, 634, 1134]
INTER_DIM = 100
VIEW_NUM = 6
CLASS_NUM = 31
D_TOTAL = ACCU_DIMS[-1]            # 1134
D_CODE = VIEW_NUM * INTER_DIM      # 600
D_CODE_PAD = 640                   # 600 -> 5*128 (lane aligned)
C_PAD = 128                        # 31  -> 128  (lane-dense output stores)
THETA = 0.05                       # soft-threshold location
NEG_INF = -1e30                    # bias for padded class columns (exp -> 0)


def adlnet_kernel(x_ref, wblk_ref, bcat_ref, w2_ref, b2_ref, out_ref):
    """One (TILE_B, 1134) batch tile -> (TILE_B, 128) log-softmax tile.

    x_ref    : (TILE_B, 1134)  f32
    wblk_ref : (1134, 640)     bf16  block-diagonal stack of the 6 weight-normed dics
    bcat_ref : (1, 640)        f32   concatenated dic biases (zero in padding)
    w2_ref   : (640, 128)      bf16  classifier weight (transposed, zero padding)
    b2_ref   : (1, 128)        f32   classifier bias (-1e30 in padded classes)
    out_ref  : (TILE_B, 128)   f32   log_softmax logits (cols >= 31 are padding)
    """
    x = x_ref[...].astype(jnp.bfloat16)            # bf16 MXU path, f32 accumulation

    # --- six weight-normed Linear layers + concat == one block-diag matmul ---
    z = jnp.dot(x, wblk_ref[...], preferred_element_type=jnp.float32) + bcat_ref[...]

    # --- soft threshold: (relu(z - th) - relu(-z - th)) / 2  (== _soft_thrsh) ---
    zs = (jnp.maximum(z - THETA, 0.0) - jnp.maximum(-z - THETA, 0.0)) * 0.5

    # --- classifier Linear (padded classes carry -1e30 bias) ---
    y = jnp.dot(zs.astype(jnp.bfloat16), w2_ref[...],
                preferred_element_type=jnp.float32) + b2_ref[...]

    # --- log_softmax along dim=1 (padded columns contribute exp(...) == 0) ---
    m = jnp.max(y, axis=1, keepdims=True)
    shifted = y - m
    lse = jnp.log(jnp.sum(jnp.exp(shifted), axis=1, keepdims=True))
    out_ref[...] = shifted - lse


def _pick_tile_b(B):
    if B >= 256:
        return 256                          # MXU-height tile (v6e/v7x), 2x on v5e
    return max(8, ((B + 7) // 8) * 8)       # single sublane-aligned tile for small B


@jax.jit
def adlnet_forward(x, wblk_p, bcat_p, w2t_p, b2_p):
    B = x.shape[0]
    tb = _pick_tile_b(B)
    Bp = ((B + tb - 1) // tb) * tb
    if Bp != B:
        x = jnp.pad(x, ((0, Bp - B), (0, 0)))

    cost = pl.CostEstimate(
        flops=2 * Bp * D_TOTAL * D_CODE_PAD + 2 * Bp * D_CODE_PAD * C_PAD,
        transcendentals=Bp * C_PAD + Bp,
        bytes_accessed=(Bp * D_TOTAL * 4 + D_TOTAL * D_CODE_PAD * 2
                        + D_CODE_PAD * C_PAD * 2 + (D_CODE_PAD + C_PAD) * 4
                        + Bp * C_PAD * 4),
    )

    out = pl.pallas_call(
        adlnet_kernel,
        out_shape=jax.ShapeDtypeStruct((Bp, C_PAD), jnp.float32),
        grid=(Bp // tb,),
        in_specs=[
            pl.BlockSpec((tb, D_TOTAL), lambda i: (i, 0)),           # x: pipelined tiles
            pl.BlockSpec((D_TOTAL, D_CODE_PAD), lambda i: (0, 0)),   # weights: fetched once,
            pl.BlockSpec((1, D_CODE_PAD), lambda i: (0, 0)),         # VMEM-resident across
            pl.BlockSpec((D_CODE_PAD, C_PAD), lambda i: (0, 0)),     # the whole batch grid
            pl.BlockSpec((1, C_PAD), lambda i: (0, 0)),
        ],
        out_specs=pl.BlockSpec((tb, C_PAD), lambda i: (i, 0)),       # lane-dense stores
        compiler_params=pltpu.CompilerParams(
            dimension_semantics=("parallel",)),                      # megacore on v7x
        cost_estimate=cost,
    )(x, wblk_p, bcat_p, w2t_p, b2_p)

    return out[:B, :CLASS_NUM]


def init_params(key):
    """Deterministic synthetic parameters matching ADLnet's shapes (f32, unpadded).

    Each dic_i is nn.utils.weight_norm(nn.Linear(viewdims[i], 100), dim=0):
        effective weight W[o, :] = g[o] * v[o, :] / ||v[o, :]||
    The effective (transposed) weights are stacked into a block-diagonal
    (1134, 600) matrix so slice->linear->concat becomes a single matmul.
    """
    keys = jax.random.split(key, 3 * VIEW_NUM + 2)
    ki = 0

    wblk = jnp.zeros((D_TOTAL, D_CODE), jnp.float32)
    biases = []
    row_start = 0
    for i, d in enumerate(VIEWDIMS):
        v = 0.1 * jax.random.normal(keys[ki], (INTER_DIM, d), jnp.float32); ki += 1
        g = jax.random.uniform(keys[ki], (INTER_DIM,), jnp.float32, 0.5, 1.5); ki += 1
        b = 0.1 * jax.random.normal(keys[ki], (INTER_DIM,), jnp.float32); ki += 1
        norm = jnp.sqrt(jnp.sum(v * v, axis=1, keepdims=True))   # per-output-row norm (dim=0)
        w_eff = g[:, None] * v / norm                            # (INTER_DIM, d)
        wblk = wblk.at[row_start:row_start + d,
                       i * INTER_DIM:(i + 1) * INTER_DIM].set(w_eff.T)
        biases.append(b)
        row_start += d
    bcat = jnp.concatenate(biases)                               # (600,)

    w2 = 0.1 * jax.random.normal(keys[ki], (CLASS_NUM, D_CODE), jnp.float32); ki += 1
    b2 = 0.1 * jax.random.normal(keys[ki], (CLASS_NUM,), jnp.float32); ki += 1
    return wblk, bcat, w2.T, b2


def pack_params(wblk, bcat, w2t, b2):
    """Pad to lane-aligned kernel layout and cast weights to bf16."""
    wblk_p = jnp.zeros((D_TOTAL, D_CODE_PAD), jnp.float32).at[:, :D_CODE].set(wblk)
    bcat_p = jnp.zeros((1, D_CODE_PAD), jnp.float32).at[0, :D_CODE].set(bcat)
    w2t_p = jnp.zeros((D_CODE_PAD, C_PAD), jnp.float32).at[:D_CODE, :CLASS_NUM].set(w2t)
    b2_p = jnp.full((1, C_PAD), NEG_INF, jnp.float32).at[0, :CLASS_NUM].set(b2)
    return (wblk_p.astype(jnp.bfloat16), bcat_p,
            w2t_p.astype(jnp.bfloat16), b2_p)


def reference_forward_f32(x, wblk, bcat, w2t, b2):
    """Pure-f32 JAX reference of the module semantics."""
    z = x @ wblk + bcat[None, :]
    zs = (jnp.maximum(z - THETA, 0.0) - jnp.maximum(-z - THETA, 0.0)) * 0.5
    y = zs @ w2t + b2[None, :]
    return jax.nn.log_softmax(y, axis=1)


def reference_forward_packed(x, wblk_p, bcat_p, w2t_p, b2_p):
    """Pure-JAX mirror of the exact kernel math (bf16 weights, padded dims)."""
    z = jnp.dot(x.astype(jnp.bfloat16), wblk_p,
                preferred_element_type=jnp.float32) + bcat_p
    zs = (jnp.maximum(z - THETA, 0.0) - jnp.maximum(-z - THETA, 0.0)) * 0.5
    y = jnp.dot(zs.astype(jnp.bfloat16), w2t_p,
                preferred_element_type=jnp.float32) + b2_p
    m = jnp.max(y, axis=1, keepdims=True)
    sh = y - m
    out = sh - jnp.log(jnp.sum(jnp.exp(sh), axis=1, keepdims=True))
    return out[:, :CLASS_NUM]


if __name__ == "__main__":
    key = jax.random.PRNGKey(0)
    kx, kx2, kp = jax.random.split(key, 3)

    wblk, bcat, w2t, b2 = init_params(kp)
    packed = pack_params(wblk, bcat, w2t, b2)

    # --- small demo batch (single tile, grid of 1) ---
    B = 8
    x = jax.random.normal(kx, (B, D_TOTAL), jnp.float32)
    out = jax.block_until_ready(adlnet_forward(x, *packed))
    assert out.shape == (B, CLASS_NUM)
    ref_exact = reference_forward_packed(x, *packed)          # same bf16/padded math
    assert jnp.allclose(out, ref_exact, atol=2e-4, rtol=2e-4)
    ref_f32 = reference_forward_f32(x, wblk, bcat, w2t, b2)   # module-semantics sanity
    assert float(jnp.max(jnp.abs(out - ref_f32))) < 0.5       # bf16 weight quantization only

    # --- ragged multi-tile batch (exercises the batch grid + padding path) ---
    B2 = 300
    x2 = jax.random.normal(kx2, (B2, D_TOTAL), jnp.float32)
    out2 = jax.block_until_ready(adlnet_forward(x2, *packed))
    assert out2.shape == (B2, CLASS_NUM)
    ref2 = reference_forward_packed(x2, *packed)
    assert jnp.allclose(out2, ref2, atol=2e-4, rtol=2e-4)

    print("KERNEL_OK")
</pallas_src>

<mosaic_0001>
module attributes {stable_mosaic.version = 11 : i64} {
  func.func @adlnet_kernel(%arg0: i32, %arg1: memref<8x1134xf32, #tpu.memory_space<vmem>>, %arg2: memref<1134x640xbf16, #tpu.memory_space<vmem>>, %arg3: memref<1x640xf32, #tpu.memory_space<vmem>>, %arg4: memref<640x128xbf16, #tpu.memory_space<vmem>>, %arg5: memref<1x128xf32, #tpu.memory_space<vmem>>, %arg6: memref<8x128xf32, #tpu.memory_space<vmem>>) attributes {dimension_semantics = [#tpu.dimension_semantics<parallel>], iteration_bounds = array<i64: 1>, scalar_prefetch = 0 : i64, scratch_operands = 0 : i64, tpu.core_type = #tpu.core_type<tc>, window_params = [{transform_indices = @transform_0, window_bounds = array<i64: 8, 1134>}, {pipeline_mode = #tpu.pipeline_mode<synchronous>, transform_indices = @transform_1, window_bounds = array<i64: 1134, 640>}, {pipeline_mode = #tpu.pipeline_mode<synchronous>, transform_indices = @transform_2, window_bounds = array<i64: 1, 640>}, {pipeline_mode = #tpu.pipeline_mode<synchronous>, transform_indices = @transform_3, window_bounds = array<i64: 640, 128>}, {pipeline_mode = #tpu.pipeline_mode<synchronous>, transform_indices = @transform_4, window_bounds = array<i64: 1, 128>}, {transform_indices = @transform_5, window_bounds = array<i64: 8, 128>}]} {
    %c0 = arith.constant 0 : index
    %c0_0 = arith.constant 0 : index
    %0 = vector.load %arg1[%c0, %c0_0] : memref<8x1134xf32, #tpu.memory_space<vmem>>, vector<8x1134xf32>
    %1 = arith.truncf %0 : vector<8x1134xf32> to vector<8x1134xbf16>
    %c0_1 = arith.constant 0 : index
    %c0_2 = arith.constant 0 : index
    %2 = vector.load %arg2[%c0_1, %c0_2] : memref<1134x640xbf16, #tpu.memory_space<vmem>>, vector<1134x640xbf16>
    %cst = arith.constant dense<0.000000e+00> : vector<8x640xf32>
    %3 = tpu.matmul %1, %2, %cst {dimension_numbers = #tpu.dot_dimension_numbers<[1], [0], [0], [1], [0, 0, 1, 1], [], []>} : vector<8x1134xbf16>, vector<1134x640xbf16>, vector<8x640xf32> -> vector<8x640xf32>
    %c0_3 = arith.constant 0 : index
    %c0_4 = arith.constant 0 : index
    %4 = vector.load %arg3[%c0_3, %c0_4] : memref<1x640xf32, #tpu.memory_space<vmem>>, vector<1x640xf32>
    %5 = vector.broadcast %4 : vector<1x640xf32> to vector<8x640xf32>
    %6 = arith.addf %3, %5 : vector<8x640xf32>
    %cst_5 = arith.constant 5.000000e-02 : f32
    %7 = vector.broadcast %cst_5 : f32 to vector<8x640xf32>
    %8 = arith.subf %6, %7 : vector<8x640xf32>
    %cst_6 = arith.constant 0.000000e+00 : f32
    %9 = vector.broadcast %cst_6 : f32 to vector<8x640xf32>
    %10 = arith.maximumf %8, %9 : vector<8x640xf32>
    %cst_7 = arith.constant 0.000000e+00 : f32
    %11 = vector.broadcast %cst_7 : f32 to vector<8x640xf32>
    %12 = arith.subf %11, %6 : vector<8x640xf32>
    %cst_8 = arith.constant 5.000000e-02 : f32
    %13 = vector.broadcast %cst_8 : f32 to vector<8x640xf32>
    %14 = arith.subf %12, %13 : vector<8x640xf32>
    %cst_9 = arith.constant 0.000000e+00 : f32
    %15 = vector.broadcast %cst_9 : f32 to vector<8x640xf32>
    %16 = arith.maximumf %14, %15 : vector<8x640xf32>
    %17 = arith.subf %10, %16 : vector<8x640xf32>
    %cst_10 = arith.constant 5.000000e-01 : f32
    %18 = vector.broadcast %cst_10 : f32 to vector<8x640xf32>
    %19 = arith.mulf %17, %18 : vector<8x640xf32>
    %20 = arith.truncf %19 : vector<8x640xf32> to vector<8x640xbf16>
    %c0_11 = arith.constant 0 : index
    %c0_12 = arith.constant 0 : index
    %21 = vector.load %arg4[%c0_11, %c0_12] : memref<640x128xbf16, #tpu.memory_space<vmem>>, vector<640x128xbf16>
    %cst_13 = arith.constant dense<0.000000e+00> : vector<8x128xf32>
    %22 = tpu.matmul %20, %21, %cst_13 {dimension_numbers = #tpu.dot_dimension_numbers<[1], [0], [0], [1], [0, 0, 1, 1], [], []>} : vector<8x640xbf16>, vector<640x128xbf16>, vector<8x128xf32> -> vector<8x128xf32>
    %c0_14 = arith.constant 0 : index
    %c0_15 = arith.constant 0 : index
    %23 = vector.load %arg5[%c0_14, %c0_15] : memref<1x128xf32, #tpu.memory_space<vmem>>, vector<1x128xf32>
    %24 = vector.broadcast %23 : vector<1x128xf32> to vector<8x128xf32>
    %25 = arith.addf %22, %24 : vector<8x128xf32>
    %cst_16 = arith.constant dense<0xFF800000> : vector<8xf32>
    %26 = vector.multi_reduction <maximumf>, %25, %cst_16 [1] : vector<8x128xf32> to vector<8xf32>
    %27 = vector.shape_cast %26 : vector<8xf32> to vector<8x1xf32>
    %28 = vector.broadcast %27 : vector<8x1xf32> to vector<8x128xf32>
    %29 = arith.subf %25, %28 : vector<8x128xf32>
    %30 = math.exp %29 : vector<8x128xf32>
    %cst_17 = arith.constant dense<0.000000e+00> : vector<8xf32>
    %31 = vector.multi_reduction <add>, %30, %cst_17 [1] : vector<8x128xf32> to vector<8xf32>
    %32 = vector.shape_cast %31 : vector<8xf32> to vector<8x1xf32>
    %33 = math.log %32 : vector<8x1xf32>
    %34 = vector.broadcast %33 : vector<8x1xf32> to vector<8x128xf32>
    %35 = arith.subf %29, %34 : vector<8x128xf32>
    %c0_18 = arith.constant 0 : index
    %c0_19 = arith.constant 0 : index
    %36 = vector.load %arg6[%c0_18, %c0_19] : memref<8x128xf32, #tpu.memory_space<vmem>>, vector<8x128xf32>
    tpu.vector_store %arg6[%c0_18, %c0_19], %35 {strides = array<i32>} : memref<8x128xf32, #tpu.memory_space<vmem>>, vector<8x128xf32>,
    return
  }
  func.func @transform_0(%arg0: i32) -> (i32, i32) {
    %c0_i32 = arith.constant 0 : i32
    %c0_i32_0 = arith.constant 0 : i32
    return %arg0, %c0_i32 : i32, i32
  }
  func.func @transform_1(%arg0: i32) -> (i32, i32) {
    %c0_i32 = arith.constant 0 : i32
    %c0_i32_0 = arith.constant 0 : i32
    %c0_i32_1 = arith.constant 0 : i32
    return %c0_i32, %c0_i32_0 : i32, i32
  }
  func.func @transform_2(%arg0: i32) -> (i32, i32) {
    %c0_i32 = arith.constant 0 : i32
    %c0_i32_0 = arith.constant 0 : i32
    %c0_i32_1 = arith.constant 0 : i32
    return %c0_i32, %c0_i32_0 : i32, i32
  }
  func.func @transform_3(%arg0: i32) -> (i32, i32) {
    %c0_i32 = arith.constant 0 : i32
    %c0_i32_0 = arith.constant 0 : i32
    %c0_i32_1 = arith.constant 0 : i32
    return %c0_i32, %c0_i32_0 : i32, i32
  }
  func.func @transform_4(%arg0: i32) -> (i32, i32) {
    %c0_i32 = arith.constant 0 : i32
    %c0_i32_0 = arith.constant 0 : i32
    %c0_i32_1 = arith.constant 0 : i32
    return %c0_i32, %c0_i32_0 : i32, i32
  }
  func.func @transform_5(%arg0: i32) -> (i32, i32) {
    %c0_i32 = arith.constant 0 : i32
    %c0_i32_0 = arith.constant 0 : i32
    return %arg0, %c0_i32 : i32, i32
  }
}

</mosaic_0001>

<llo_original>
// kernel: adlnet_forward.1
$region0: #{adlnet_forward.1}
  #allocation0 [shape = 'u32[]', space=smem, size = 0x4, offset = 0x4, fixed_abs, tag = 'smem constant byte address 0x4 - core index']
  #allocation1 [shape = 'u32[72,128]{1,0:T(1,128)}', space=vmem, size = 0x9000, scoped, tag = 'internal scratch']
  %s0 = inlined_call_operand.hbm [shape: f32[8,1134], index: 0, kind: input, shape index: {}]
  %s1 = inlined_call_operand.hbm [shape: bf16[1134,640], index: 1, kind: input, shape index: {}]
  %s2 = inlined_call_operand.hbm [shape: f32[1,640], index: 2, kind: input, shape index: {}]
  %s3 = inlined_call_operand.hbm [shape: bf16[640,128], index: 3, kind: input, shape index: {}]
  %s4 = inlined_call_operand.hbm [shape: f32[1,128], index: 4, kind: input, shape index: {}]
  %s5 = inlined_call_operand.hbm [shape: f32[8,128], index: 5, kind: output, shape index: {}]
  %s6 = sld [smem:[#allocation0]]
  $region50: #{adlnet_forward.1} parent=0
    _
  %s8 = ssub.s32 1, %s6
  %s9 = scalar_select 0, %s8, %s6
  $region1: #{adlnet_forward.1} parent=0
    #allocation2 [shape = 'u8[36864]{0}', space=vmem, size = 0x9000, scoped, tag = 'input window, operand 0, single buffered']
    #allocation3 [shape = 's32[1]{0}', space=sflag, size = 0x4, scoped, tag = 'scoped memory for adlnet_forward.1']
    #allocation4 [shape = 's32[1]{0}', space=sflag, size = 0x4, scoped, tag = 'scoped memory for adlnet_forward.1']
    #allocation5 [shape = 'u8[1454080]{0}', space=vmem, size = 0x163000, scoped, tag = 'input window, operand 1, single buffered']
    #allocation6 [shape = 's32[1]{0}', space=sflag, size = 0x4, scoped, tag = 'scoped memory for adlnet_forward.1']
    #allocation7 [shape = 'u8[2560]{0}', space=vmem, size = 0xc00, scoped, tag = 'input window, operand 2, single buffered']
    #allocation8 [shape = 'u8[163840]{0}', space=vmem, size = 0x28000, scoped, tag = 'input window, operand 3, single buffered']
    #allocation9 [shape = 's32[1]{0}', space=sflag, size = 0x4, scoped, tag = 'scoped memory for adlnet_forward.1']
    #allocation10 [shape = 'u8[512]{0}', space=vmem, size = 0x400, scoped, tag = 'input window, operand 4, single buffered']
    #allocation11 [shape = 'u8[4096]{0}', space=vmem, size = 0x1000, scoped, tag = 'output window, operand 0, single buffered']
    %10 = vsyncpa [#allocation3], 0
    %11 = vsyncpa [#allocation6], 0
    %12 = vsyncpa [#allocation9], 0
    %13 = vsyncpa [#allocation4], 0
    // Predicated region
    $region2: #{adlnet_forward.1} parent=1 // pred_check
      _
    $region3: #{adlnet_forward.1} parent=1 // pred_check_branch
      %15 = sbr.rel (0) target = $region5
    $region4: #{adlnet_forward.1} parent=1 // pred_region
      %17 = vsyncadd [#allocation3], 0
      %s19 = sshll.u32 %s0, 4
      %s20 = int_to_ptr.hbm [resolvable:$true] %s19
      %s21 = sshll.u32 [#allocation2], 4
      %s22 = int_to_ptr.vmem [resolvable:$true] %s21
      %24 = dma.hbm_to_vmem [thread:$0]  %s20, 1152, %s22, [#allocation3]
    $region5: #{adlnet_forward.1} parent=1 // pred_fallthru
      _
    // Predicated region
    $region6: #{adlnet_forward.1} parent=1 // pred_check
      _
    $region7: #{adlnet_forward.1} parent=1 // pred_check_branch
      %26 = sbr.rel (0) target = $region9
    $region8: #{adlnet_forward.1} parent=1 // pred_region
      %28 = vsyncadd [#allocation6], 0
      %s29 = sshll.u32 %s1, 4
      %s30 = int_to_ptr.hbm [resolvable:$true] %s29
      %s31 = sshll.u32 [#allocation5], 4
      %s32 = int_to_ptr.vmem [resolvable:$true] %s31
      %37 = dma.hbm_to_vmem [thread:$0]  %s30, 45440, %s32, [#allocation6], 320, 320, 20
    $region9: #{adlnet_forward.1} parent=1 // pred_fallthru
      _
    // Predicated region
    $region10: #{adlnet_forward.1} parent=1 // pred_check
      _
    $region11: #{adlnet_forward.1} parent=1 // pred_check_branch
      %39 = sbr.rel (0) target = $region13
    $region12: #{adlnet_forward.1} parent=1 // pred_region
      %41 = vsyncadd [#allocation6], 0
      %s43 = sshll.u32 %s2, 4
      %s44 = int_to_ptr.hbm [resolvable:$true] %s43
      %s45 = sshll.u32 [#allocation7], 4
      %s46 = int_to_ptr.vmem [resolvable:$true] %s45
      %48 = dma.hbm_to_vmem [thread:$0]  %s44, 80, %s46, [#allocation6]
    $region13: #{adlnet_forward.1} parent=1 // pred_fallthru
      _
    // Predicated region
    $region14: #{adlnet_forward.1} parent=1 // pred_check
      _
    $region15: #{adlnet_forward.1} parent=1 // pred_check_branch
      %50 = sbr.rel (0) target = $region17
    $region16: #{adlnet_forward.1} parent=1 // pred_region
      %52 = vsyncadd [#allocation9], 0
      %s53 = sshll.u32 %s3, 4
      %s54 = int_to_ptr.hbm [resolvable:$true] %s53
      %s55 = sshll.u32 [#allocation8], 4
      %s56 = int_to_ptr.vmem [resolvable:$true] %s55
      %61 = dma.hbm_to_vmem [thread:$0]  %s54, 5120, %s56, [#allocation9], 64, 64, 4
    $region17: #{adlnet_forward.1} parent=1 // pred_fallthru
      _
    // Predicated region
    $region18: #{adlnet_forward.1} parent=1 // pred_check
      _
    $region19: #{adlnet_forward.1} parent=1 // pred_check_branch
      %63 = sbr.rel (0) target = $region21
    $region20: #{adlnet_forward.1} parent=1 // pred_region
      %65 = vsyncadd [#allocation9], 0
      %s67 = sshll.u32 %s4, 4
      %s68 = int_to_ptr.hbm [resolvable:$true] %s67
      %s69 = sshll.u32 [#allocation10], 4
      %s70 = int_to_ptr.vmem [resolvable:$true] %s69
      %72 = dma.hbm_to_vmem [thread:$0]  %s68, 16, %s70, [#allocation9]
    $region21: #{adlnet_forward.1} parent=1 // pred_fallthru
      _
    // Predicated region
    $region22: #{adlnet_forward.1} parent=1 // pred_check
      _
    $region23: #{adlnet_forward.1} parent=1 // pred_check_branch
      %74 = sbr.rel (0) target = $region25
    $region24: #{adlnet_forward.1} parent=1 // pred_region
      %76 = dma.done [#allocation3], 1152
    $region25: #{adlnet_forward.1} parent=1 // pred_fallthru
      _
    // Predicated region
    $region26: #{adlnet_forward.1} parent=1 // pred_check
      _
    $region27: #{adlnet_forward.1} parent=1 // pred_check_branch
      %78 = sbr.rel (0) target = $region29
    $region28: #{adlnet_forward.1} parent=1 // pred_region
      %80 = dma.done [#allocation6], 45440
    $region29: #{adlnet_forward.1} parent=1 // pred_fallthru
      _
    // Predicated region
    $region30: #{adlnet_forward.1} parent=1 // pred_check
      _
    $region31: #{adlnet_forward.1} parent=1 // pred_check_branch
      %82 = sbr.rel (0) target = $region33
    $region32: #{adlnet_forward.1} parent=1 // pred_region
      %84 = dma.done [#allocation6], 80
    $region33: #{adlnet_forward.1} parent=1 // pred_fallthru
      _
    // Predicated region
    $region34: #{adlnet_forward.1} parent=1 // pred_check
      _
    $region35: #{adlnet_forward.1} parent=1 // pred_check_branch
      %86 = sbr.rel (0) target = $region37
    $region36: #{adlnet_forward.1} parent=1 // pred_region
      %88 = dma.done [#allocation9], 5120
    $region37: #{adlnet_forward.1} parent=1 // pred_fallthru
      _
    // Predicated region
    $region38: #{adlnet_forward.1} parent=1 // pred_check
      _
    $region39: #{adlnet_forward.1} parent=1 // pred_check_branch
      %90 = sbr.rel (0) target = $region41
    $region40: #{adlnet_forward.1} parent=1 // pred_region
      %92 = dma.done [#allocation9], 16
    $region41: #{adlnet_forward.1} parent=1 // pred_fallthru
      _
    %v94 = vld [vmem:[#allocation2] sm:$0xff]
    %v95 = vld [vmem:[#allocation2 + $0x8] sm:$0xff]
    %v96 = vld [vmem:[#allocation2 + $0x10] sm:$0xff]
    %v97 = vld [vmem:[#allocation2 + $0x18] sm:$0xff]
    %v98 = vld [vmem:[#allocation2 + $0x20] sm:$0xff]
    %v99 = vld [vmem:[#allocation2 + $0x28] sm:$0xff]
    %v100 = vld [vmem:[#allocation2 + $0x30] sm:$0xff]
    %v101 = vld [vmem:[#allocation2 + $0x38] sm:$0xff]
    %v102 = vld [vmem:[#allocation2 + $0x40] sm:$0xff]
    %v103 = vpack.c.bf16 %v94, %v94
    %v104 = vpack.c.bf16 %v95, %v95
    %v105 = vpack.c.bf16 %v96, %v96
    %v106 = vpack.c.bf16 %v97, %v97
    %v107 = vpack.c.bf16 %v98, %v98
    %v108 = vpack.c.bf16 %v99, %v99
    %v109 = vpack.c.bf16 %v100, %v100
    %v110 = vpack.c.bf16 %v101, %v101
    %v111 = vpack.c.bf16 %v102, %v102
    %v112 = vld [vmem:[#allocation5] sm:$0xff]
    %v113 = vld [vmem:[#allocation5 + $0x8] sm:$0xff]
    %v114 = vld [vmem:[#allocation5 + $0x10] sm:$0xf]
    %v115 = vld [vmem:[#allocation5 + $0x14] sm:$0xff]
    %v116 = vld [vmem:[#allocation5 + $0x1c] sm:$0xff]
    %v117 = vld [vmem:[#allocation5 + $0x24] sm:$0xf]
    %v118 = vld [vmem:[#allocation5 + $0x28] sm:$0xff]
    %v119 = vld [vmem:[#allocation5 + $0x30] sm:$0xff]
    %v120 = vld [vmem:[#allocation5 + $0x38] sm:$0xf]
    %v121 = vld [vmem:[#allocation5 + $0x3c] sm:$0xff]
    %v122 = vld [vmem:[#allocation5 + $0x44] sm:$0xff]
    %v123 = vld [vmem:[#allocation5 + $0x4c] sm:$0xf]
    %v124 = vld [vmem:[#allocation5 + $0x50] sm:$0xff]
    %v125 = vld [vmem:[#allocation5 + $0x58] sm:$0xff]
    %v126 = vld [vmem:[#allocation5 + $0x60] sm:$0xf]
    %v127 = vld [vmem:[#allocation5 + $0x64] sm:$0xff]
    %v128 = vld [vmem:[#allocation5 + $0x6c] sm:$0xff]
    %v129 = vld [vmem:[#allocation5 + $0x74] sm:$0xf]
    %v130 = vld [vmem:[#allocation5 + $0x78] sm:$0xff]
    %v131 = vld [vmem:[#allocation5 + $0x80] sm:$0xff]
    %v132 = vld [vmem:[#allocation5 + $0x88] sm:$0xf]
    %v133 = vld [vmem:[#allocation5 + $0x8c] sm:$0xff]
    %v134 = vld [vmem:[#allocation5 + $0x94] sm:$0xff]
    %v135 = vld [vmem:[#allocation5 + $0x9c] sm:$0xf]
    %v136 = vld [vmem:[#allocation5 + $0xa0] sm:$0xff]
    %v137 = vld [vmem:[#allocation5 + $0xa8] sm:$0xff]
    %v138 = vld [vmem:[#allocation5 + $0xb0] sm:$0xf]
    %v139 = vld [vmem:[#allocation5 + $0xb4] sm:$0xff]
    %v140 = vld [vmem:[#allocation5 + $0xbc] sm:$0xff]
    %v141 = vld [vmem:[#allocation5 + $0xc4] sm:$0xf]
    %v142 = vld [vmem:[#allocation5 + $0xc8] sm:$0xff]
    %v143 = vld [vmem:[#allocation5 + $0xd0] sm:$0xff]
    %v144 = vld [vmem:[#allocation5 + $0xd8] sm:$0xf]
    %v145 = vld [vmem:[#allocation5 + $0xdc] sm:$0xff]
    %v146 = vld [vmem:[#allocation5 + $0xe4] sm:$0xff]
    %v147 = vld [vmem:[#allocation5 + $0xec] sm:$0xf]
    %v148 = vld [vmem:[#allocation5 + $0xf0] sm:$0xff]
    %v149 = vld [vmem:[#allocation5 + $0xf8] sm:$0xff]
    %v150 = vld [vmem:[#allocation5 + $0x100] sm:$0xf]
    %v151 = vld [vmem:[#allocation5 + $0x104] sm:$0xff]
    %v152 = vld [vmem:[#allocation5 + $0x10c] sm:$0xff]
    %v153 = vld [vmem:[#allocation5 + $0x114] sm:$0xf]
    %v154 = vld [vmem:[#allocation5 + $0x118] sm:$0xff]
    %v155 = vld [vmem:[#allocation5 + $0x120] sm:$0xff]
    %v156 = vld [vmem:[#allocation5 + $0x128] sm:$0xf]
    %v157 = vld [vmem:[#allocation5 + $0x12c] sm:$0xff]
    %v158 = vld [vmem:[#allocation5 + $0x134] sm:$0xff]
    %v159 = vld [vmem:[#allocation5 + $0x13c] sm:$0xf]
    %v160 = vld [vmem:[#allocation5 + $0x140] sm:$0xff]
    %v161 = vld [vmem:[#allocation5 + $0x148] sm:$0xff]
    %v162 = vld [vmem:[#allocation5 + $0x150] sm:$0xf]
    %v163 = vld [vmem:[#allocation5 + $0x154] sm:$0xff]
    %v164 = vld [vmem:[#allocation5 + $0x15c] sm:$0xff]
    %v165 = vld [vmem:[#allocation5 + $0x164] sm:$0xf]
    %v166 = vld [vmem:[#allocation5 + $0x168] sm:$0xff]
    %v167 = vld [vmem:[#allocation5 + $0x170] sm:$0xff]
    %v168 = vld [vmem:[#allocation5 + $0x178] sm:$0xf]
    %v169 = vld [vmem:[#allocation5 + $0x17c] sm:$0xff]
    %v170 = vld [vmem:[#allocation5 + $0x184] sm:$0xff]
    %v171 = vld [vmem:[#allocation5 + $0x18c] sm:$0xf]
    %v172 = vld [vmem:[#allocation5 + $0x190] sm:$0xff]
    %v173 = vld [vmem:[#allocation5 + $0x198] sm:$0xff]
    %v174 = vld [vmem:[#allocation5 + $0x1a0] sm:$0xf]
    %v175 = vld [vmem:[#allocation5 + $0x1a4] sm:$0xff]
    %v176 = vld [vmem:[#allocation5 + $0x1ac] sm:$0xff]
    %v177 = vld [vmem:[#allocation5 + $0x1b4] sm:$0xf]
    %v178 = vld [vmem:[#allocation5 + $0x1b8] sm:$0xff]
    %v179 = vld [vmem:[#allocation5 + $0x1c0] sm:$0xff]
    %v180 = vld [vmem:[#allocation5 + $0x1c8] sm:$0xf]
    %v181 = vld [vmem:[#allocation5 + $0x1cc] sm:$0xff]
    %v182 = vld [vmem:[#allocation5 + $0x1d4] sm:$0xff]
    %v183 = vld [vmem:[#allocation5 + $0x1dc] sm:$0xf]
    %v184 = vld [vmem:[#allocation5 + $0x1e0] sm:$0xff]
    %v185 = vld [vmem:[#allocation5 + $0x1e8] sm:$0xff]
    %v186 = vld [vmem:[#allocation5 + $0x1f0] sm:$0xf]
    %v187 = vld [vmem:[#allocation5 + $0x1f4] sm:$0xff]
    %v188 = vld [vmem:[#allocation5 + $0x1fc] sm:$0xff]
    %v189 = vld [vmem:[#allocation5 + $0x204] sm:$0xf]
    %v190 = vld [vmem:[#allocation5 + $0x208] sm:$0xff]
    %v191 = vld [vmem:[#allocation5 + $0x210] sm:$0xff]
    %v192 = vld [vmem:[#allocation5 + $0x218] sm:$0xf]
    %v193 = vld [vmem:[#allocation5 + $0x21c] sm:$0xff]
    %v194 = vld [vmem:[#allocation5 + $0x224] sm:$0xff]
    %v195 = vld [vmem:[#allocation5 + $0x22c] sm:$0xf]
    %v196 = vld [vmem:[#allocation5 + $0x230] sm:$0xff]
    %v197 = vld [vmem:[#allocation5 + $0x238] sm:$0xff]
    %v198 = vld [vmem:[#allocation5 + $0x240] sm:$0xf]
    %v199 = vld [vmem:[#allocation5 + $0x244] sm:$0xff]
    %v200 = vld [vmem:[#allocation5 + $0x24c] sm:$0xff]
    %v201 = vld [vmem:[#allocation5 + $0x254] sm:$0xf]
    %v202 = vld [vmem:[#allocation5 + $0x258] sm:$0xff]
    %v203 = vld [vmem:[#allocation5 + $0x260] sm:$0xff]
    %v204 = vld [vmem:[#allocation5 + $0x268] sm:$0xf]
    %v205 = vld [vmem:[#allocation5 + $0x26c] sm:$0xff]
    %v206 = vld [vmem:[#allocation5 + $0x274] sm:$0xff]
    %v207 = vld [vmem:[#allocation5 + $0x27c] sm:$0xf]
    %v208 = vld [vmem:[#allocation5 + $0x280] sm:$0xff]
    %v209 = vld [vmem:[#allocation5 + $0x288] sm:$0xff]
    %v210 = vld [vmem:[#allocation5 + $0x290] sm:$0xf]
    %v211 = vld [vmem:[#allocation5 + $0x294] sm:$0xff]
    %v212 = vld [vmem:[#allocation5 + $0x29c] sm:$0xff]
    %v213 = vld [vmem:[#allocation5 + $0x2a4] sm:$0xf]
    %v214 = vld [vmem:[#allocation5 + $0x2a8] sm:$0xff]
    %v215 = vld [vmem:[#allocation5 + $0x2b0] sm:$0xff]
    %v216 = vld [vmem:[#allocation5 + $0x2b8] sm:$0xf]
    %v217 = vld [vmem:[#allocation5 + $0x2bc] sm:$0xff]
    %v218 = vld [vmem:[#allocation5 + $0x2c4] sm:$0xff]
    %v219 = vld [vmem:[#allocation5 + $0x2cc] sm:$0xf]
    %v220 = vld [vmem:[#allocation5 + $0x2d0] sm:$0xff]
    %v221 = vld [vmem:[#allocation5 + $0x2d8] sm:$0xff]
    %v222 = vld [vmem:[#allocation5 + $0x2e0] sm:$0xf]
    %v223 = vld [vmem:[#allocation5 + $0x2e4] sm:$0xff]
    %v224 = vld [vmem:[#allocation5 + $0x2ec] sm:$0xff]
    %v225 = vld [vmem:[#allocation5 + $0x2f4] sm:$0xf]
    %v226 = vld [vmem:[#allocation5 + $0x2f8] sm:$0xff]
    %v227 = vld [vmem:[#allocation5 + $0x300] sm:$0xff]
    %v228 = vld [vmem:[#allocation5 + $0x308] sm:$0xf]
    %v229 = vld [vmem:[#allocation5 + $0x30c] sm:$0xff]
    %v230 = vld [vmem:[#allocation5 + $0x314] sm:$0xff]
    %v231 = vld [vmem:[#allocation5 + $0x31c] sm:$0xf]
    %v232 = vld [vmem:[#allocation5 + $0x320] sm:$0xff]
    %v233 = vld [vmem:[#allocation5 + $0x328] sm:$0xff]
    %v234 = vld [vmem:[#allocation5 + $0x330] sm:$0xf]
    %v235 = vld [vmem:[#allocation5 + $0x334] sm:$0xff]
    %v236 = vld [vmem:[#allocation5 + $0x33c] sm:$0xff]
    %v237 = vld [vmem:[#allocation5 + $0x344] sm:$0xf]
    %v238 = vld [vmem:[#allocation5 + $0x348] sm:$0xff]
    %v239 = vld [vmem:[#allocation5 + $0x350] sm:$0xff]
    %v240 = vld [vmem:[#allocation5 + $0x358] sm:$0xf]
    %v241 = vld [vmem:[#allocation5 + $0x35c] sm:$0xff]
    %v242 = vld [vmem:[#allocation5 + $0x364] sm:$0xff]
    %v243 = vld [vmem:[#allocation5 + $0x36c] sm:$0xf]
    %v244 = vld [vmem:[#allocation5 + $0x370] sm:$0xff]
    %v245 = vld [vmem:[#allocation5 + $0x378] sm:$0xff]
    %v246 = vld [vmem:[#allocation5 + $0x380] sm:$0xf]
    %v247 = vld [vmem:[#allocation5 + $0x384] sm:$0xff]
    %v248 = vld [vmem:[#allocation5 + $0x38c] sm:$0xff]
    %v249 = vld [vmem:[#allocation5 + $0x394] sm:$0xf]
    %v250 = vld [vmem:[#allocation5 + $0x398] sm:$0xff]
    %v251 = vld [vmem:[#allocation5 + $0x3a0] sm:$0xff]
    %v252 = vld [vmem:[#allocation5 + $0x3a8] sm:$0xf]
    %v253 = vld [vmem:[#allocation5 + $0x3ac] sm:$0xff]
    %v254 = vld [vmem:[#allocation5 + $0x3b4] sm:$0xff]
    %v255 = vld [vmem:[#allocation5 + $0x3bc] sm:$0xf]
    %v256 = vld [vmem:[#allocation5 + $0x3c0] sm:$0xff]
    %v257 = vld [vmem:[#allocation5 + $0x3c8] sm:$0xff]
    %v258 = vld [vmem:[#allocation5 + $0x3d0] sm:$0xf]
    %v259 = vld [vmem:[#allocation5 + $0x3d4] sm:$0xff]
    %v260 = vld [vmem:[#allocation5 + $0x3dc] sm:$0xff]
    %v261 = vld [vmem:[#allocation5 + $0x3e4] sm:$0xf]
    %v262 = vld [vmem:[#allocation5 + $0x3e8] sm:$0xff]
    %v263 = vld [vmem:[#allocation5 + $0x3f0] sm:$0xff]
    %v264 = vld [vmem:[#allocation5 + $0x3f8] sm:$0xf]
    %v265 = vld [vmem:[#allocation5 + $0x3fc] sm:$0xff]
    %v266 = vld [vmem:[#allocation5 + $0x404] sm:$0xff]
    %v267 = vld [vmem:[#allocation5 + $0x40c] sm:$0xf]
    %v268 = vld [vmem:[#allocation5 + $0x410] sm:$0xff]
    %v269 = vld [vmem:[#allocation5 + $0x418] sm:$0xff]
    %v270 = vld [vmem:[#allocation5 + $0x420] sm:$0xf]
    %v271 = vld [vmem:[#allocation5 + $0x424] sm:$0xff]
    %v272 = vld [vmem:[#allocation5 + $0x42c] sm:$0xff]
    %v273 = vld [vmem:[#allocation5 + $0x434] sm:$0xf]
    %v274 = vld [vmem:[#allocation5 + $0x438] sm:$0xff]
    %v275 = vld [vmem:[#allocation5 + $0x440] sm:$0xff]
    %v276 = vld [vmem:[#allocation5 + $0x448] sm:$0xf]
    %v277 = vld [vmem:[#allocation5 + $0x44c] sm:$0xff]
    %v278 = vld [vmem:[#allocation5 + $0x454] sm:$0xff]
    %v279 = vld [vmem:[#allocation5 + $0x45c] sm:$0xf]
    %v280 = vld [vmem:[#allocation5 + $0x460] sm:$0xff]
    %v281 = vld [vmem:[#allocation5 + $0x468] sm:$0xff]
    %v282 = vld [vmem:[#allocation5 + $0x470] sm:$0xf]
    %v283 = vld [vmem:[#allocation5 + $0x474] sm:$0xff]
    %v284 = vld [vmem:[#allocation5 + $0x47c] sm:$0xff]
    %v285 = vld [vmem:[#allocation5 + $0x484] sm:$0xf]
    %v286 = vld [vmem:[#allocation5 + $0x488] sm:$0xff]
    %v287 = vld [vmem:[#allocation5 + $0x490] sm:$0xff]
    %v288 = vld [vmem:[#allocation5 + $0x498] sm:$0xf]
    %v289 = vld [vmem:[#allocation5 + $0x49c] sm:$0xff]
    %v290 = vld [vmem:[#allocation5 + $0x4a4] sm:$0xff]
    %v291 = vld [vmem:[#allocation5 + $0x4ac] sm:$0xf]
    %v292 = vld [vmem:[#allocation5 + $0x4b0] sm:$0xff]
    %v293 = vld [vmem:[#allocation5 + $0x4b8] sm:$0xff]
    %v294 = vld [vmem:[#allocation5 + $0x4c0] sm:$0xf]
    %v295 = vld [vmem:[#allocation5 + $0x4c4] sm:$0xff]
    %v296 = vld [vmem:[#allocation5 + $0x4cc] sm:$0xff]
    %v297 = vld [vmem:[#allocation5 + $0x4d4] sm:$0xf]
    %v298 = vld [vmem:[#allocation5 + $0x4d8] sm:$0xff]
    %v299 = vld [vmem:[#allocation5 + $0x4e0] sm:$0xff]
    %v300 = vld [vmem:[#allocation5 + $0x4e8] sm:$0xf]
    %v301 = vld [vmem:[#allocation5 + $0x4ec] sm:$0xff]
    %v302 = vld [vmem:[#allocation5 + $0x4f4] sm:$0xff]
    %v303 = vld [vmem:[#allocation5 + $0x4fc] sm:$0xf]
    %v304 = vld [vmem:[#allocation5 + $0x500] sm:$0xff]
    %v305 = vld [vmem:[#allocation5 + $0x508] sm:$0xff]
    %v306 = vld [vmem:[#allocation5 + $0x510] sm:$0xf]
    %v307 = vld [vmem:[#allocation5 + $0x514] sm:$0xff]
    %v308 = vld [vmem:[#allocation5 + $0x51c] sm:$0xff]
    %v309 = vld [vmem:[#allocation5 + $0x524] sm:$0xf]
    %v310 = vld [vmem:[#allocation5 + $0x528] sm:$0xff]
    %v311 = vld [vmem:[#allocation5 + $0x530] sm:$0xff]
    %v312 = vld [vmem:[#allocation5 + $0x538] sm:$0xf]
    %v313 = vld [vmem:[#allocation5 + $0x53c] sm:$0xff]
    %v314 = vld [vmem:[#allocation5 + $0x544] sm:$0xff]
    %v315 = vld [vmem:[#allocation5 + $0x54c] sm:$0xf]
    %v316 = vld [vmem:[#allocation5 + $0x550] sm:$0xff]
    %v317 = vld [vmem:[#allocation5 + $0x558] sm:$0xff]
    %v318 = vld [vmem:[#allocation5 + $0x560] sm:$0xf]
    %v319 = vld [vmem:[#allocation5 + $0x564] sm:$0xff]
    %v320 = vld [vmem:[#allocation5 + $0x56c] sm:$0xff]
    %v321 = vld [vmem:[#allocation5 + $0x574] sm:$0xf]
    %v322 = vld [vmem:[#allocation5 + $0x578] sm:$0xff]
    %v323 = vld [vmem:[#allocation5 + $0x580] sm:$0xff]
    %v324 = vld [vmem:[#allocation5 + $0x588] sm:$0xf]
    %v325 = vld [vmem:[#allocation5 + $0x58c] sm:$0xff]
    %v326 = vld [vmem:[#allocation5 + $0x594] sm:$0xff]
    %v327 = vld [vmem:[#allocation5 + $0x59c] sm:$0xf]
    %v328 = vld [vmem:[#allocation5 + $0x5a0] sm:$0xff]
    %v329 = vld [vmem:[#allocation5 + $0x5a8] sm:$0xff]
    %v330 = vld [vmem:[#allocation5 + $0x5b0] sm:$0xf]
    %v331 = vld [vmem:[#allocation5 + $0x5b4] sm:$0xff]
    %v332 = vld [vmem:[#allocation5 + $0x5bc] sm:$0xff]
    %v333 = vld [vmem:[#allocation5 + $0x5c4] sm:$0xf]
    %v334 = vld [vmem:[#allocation5 + $0x5c8] sm:$0xff]
    %v335 = vld [vmem:[#allocation5 + $0x5d0] sm:$0xff]
    %v336 = vld [vmem:[#allocation5 + $0x5d8] sm:$0xf]
    %v337 = vld [vmem:[#allocation5 + $0x5dc] sm:$0xff]
    %v338 = vld [vmem:[#allocation5 + $0x5e4] sm:$0xff]
    %v339 = vld [vmem:[#allocation5 + $0x5ec] sm:$0xf]
    %v340 = vld [vmem:[#allocation5 + $0x5f0] sm:$0xff]
    %v341 = vld [vmem:[#allocation5 + $0x5f8] sm:$0xff]
    %v342 = vld [vmem:[#allocation5 + $0x600] sm:$0xf]
    %v343 = vld [vmem:[#allocation5 + $0x604] sm:$0xff]
    %v344 = vld [vmem:[#allocation5 + $0x60c] sm:$0xff]
    %v345 = vld [vmem:[#allocation5 + $0x614] sm:$0xf]
    %v346 = vld [vmem:[#allocation5 + $0x618] sm:$0xff]
    %v347 = vld [vmem:[#allocation5 + $0x620] sm:$0xff]
    %v348 = vld [vmem:[#allocation5 + $0x628] sm:$0xf]
    %v349 = vld [vmem:[#allocation5 + $0x62c] sm:$0xff]
    %v350 = vld [vmem:[#allocation5 + $0x634] sm:$0xff]
    %v351 = vld [vmem:[#allocation5 + $0x63c] sm:$0xf]
    %v352 = vld [vmem:[#allocation5 + $0x640] sm:$0xff]
    %v353 = vld [vmem:[#allocation5 + $0x648] sm:$0xff]
    %v354 = vld [vmem:[#allocation5 + $0x650] sm:$0xf]
    %v355 = vld [vmem:[#allocation5 + $0x654] sm:$0xff]
    %v356 = vld [vmem:[#allocation5 + $0x65c] sm:$0xff]
    %v357 = vld [vmem:[#allocation5 + $0x664] sm:$0xf]
    %v358 = vld [vmem:[#allocation5 + $0x668] sm:$0xff]
    %v359 = vld [vmem:[#allocation5 + $0x670] sm:$0xff]
    %v360 = vld [vmem:[#allocation5 + $0x678] sm:$0xf]
    %v361 = vld [vmem:[#allocation5 + $0x67c] sm:$0xff]
    %v362 = vld [vmem:[#allocation5 + $0x684] sm:$0xff]
    %v363 = vld [vmem:[#allocation5 + $0x68c] sm:$0xf]
    %v364 = vld [vmem:[#allocation5 + $0x690] sm:$0xff]
    %v365 = vld [vmem:[#allocation5 + $0x698] sm:$0xff]
    %v366 = vld [vmem:[#allocation5 + $0x6a0] sm:$0xf]
    %v367 = vld [vmem:[#allocation5 + $0x6a4] sm:$0xff]
    %v368 = vld [vmem:[#allocation5 + $0x6ac] sm:$0xff]
    %v369 = vld [vmem:[#allocation5 + $0x6b4] sm:$0xf]
    %v370 = vld [vmem:[#allocation5 + $0x6b8] sm:$0xff]
    %v371 = vld [vmem:[#allocation5 + $0x6c0] sm:$0xff]
    %v372 = vld [vmem:[#allocation5 + $0x6c8] sm:$0xf]
    %v373 = vld [vmem:[#allocation5 + $0x6cc] sm:$0xff]
    %v374 = vld [vmem:[#allocation5 + $0x6d4] sm:$0xff]
    %v375 = vld [vmem:[#allocation5 + $0x6dc] sm:$0xf]
    %v376 = vld [vmem:[#allocation5 + $0x6e0] sm:$0xff]
    %v377 = vld [vmem:[#allocation5 + $0x6e8] sm:$0xff]
    %v378 = vld [vmem:[#allocation5 + $0x6f0] sm:$0xf]
    %v379 = vld [vmem:[#allocation5 + $0x6f4] sm:$0xff]
    %v380 = vld [vmem:[#allocation5 + $0x6fc] sm:$0xff]
    %v381 = vld [vmem:[#allocation5 + $0x704] sm:$0xf]
    %v382 = vld [vmem:[#allocation5 + $0x708] sm:$0xff]
    %v383 = vld [vmem:[#allocation5 + $0x710] sm:$0xff]
    %v384 = vld [vmem:[#allocation5 + $0x718] sm:$0xf]
    %v385 = vld [vmem:[#allocation5 + $0x71c] sm:$0xff]
    %v386 = vld [vmem:[#allocation5 + $0x724] sm:$0xff]
    %v387 = vld [vmem:[#allocation5 + $0x72c] sm:$0xf]
    %v388 = vld [vmem:[#allocation5 + $0x730] sm:$0xff]
    %v389 = vld [vmem:[#allocation5 + $0x738] sm:$0xff]
    %v390 = vld [vmem:[#allocation5 + $0x740] sm:$0xf]
    %v391 = vld [vmem:[#allocation5 + $0x744] sm:$0xff]
    %v392 = vld [vmem:[#allocation5 + $0x74c] sm:$0xff]
    %v393 = vld [vmem:[#allocation5 + $0x754] sm:$0xf]
    %v394 = vld [vmem:[#allocation5 + $0x758] sm:$0xff]
    %v395 = vld [vmem:[#allocation5 + $0x760] sm:$0xff]
    %v396 = vld [vmem:[#allocation5 + $0x768] sm:$0xf]
    %v397 = vld [vmem:[#allocation5 + $0x76c] sm:$0xff]
    %v398 = vld [vmem:[#allocation5 + $0x774] sm:$0xff]
    %v399 = vld [vmem:[#allocation5 + $0x77c] sm:$0xf]
    %v400 = vld [vmem:[#allocation5 + $0x780] sm:$0xff]
    %v401 = vld [vmem:[#allocation5 + $0x788] sm:$0xff]
    %v402 = vld [vmem:[#allocation5 + $0x790] sm:$0xf]
    %v403 = vld [vmem:[#allocation5 + $0x794] sm:$0xff]
    %v404 = vld [vmem:[#allocation5 + $0x79c] sm:$0xff]
    %v405 = vld [vmem:[#allocation5 + $0x7a4] sm:$0xf]
    %v406 = vld [vmem:[#allocation5 + $0x7a8] sm:$0xff]
    %v407 = vld [vmem:[#allocation5 + $0x7b0] sm:$0xff]
    %v408 = vld [vmem:[#allocation5 + $0x7b8] sm:$0xf]
    %v409 = vld [vmem:[#allocation5 + $0x7bc] sm:$0xff]
    %v410 = vld [vmem:[#allocation5 + $0x7c4] sm:$0xff]
    %v411 = vld [vmem:[#allocation5 + $0x7cc] sm:$0xf]
    %v412 = vld [vmem:[#allocation5 + $0x7d0] sm:$0xff]
    %v413 = vld [vmem:[#allocation5 + $0x7d8] sm:$0xff]
    %v414 = vld [vmem:[#allocation5 + $0x7e0] sm:$0xf]
    %v415 = vld [vmem:[#allocation5 + $0x7e4] sm:$0xff]
    %v416 = vld [vmem:[#allocation5 + $0x7ec] sm:$0xff]
    %v417 = vld [vmem:[#allocation5 + $0x7f4] sm:$0xf]
    %v418 = vld [vmem:[#allocation5 + $0x7f8] sm:$0xff]
    %v419 = vld [vmem:[#allocation5 + $0x800] sm:$0xff]
    %v420 = vld [vmem:[#allocation5 + $0x808] sm:$0xf]
    %v421 = vld [vmem:[#allocation5 + $0x80c] sm:$0xff]
    %v422 = vld [vmem:[#allocation5 + $0x814] sm:$0xff]
    %v423 = vld [vmem:[#allocation5 + $0x81c] sm:$0xf]
    %v424 = vld [vmem:[#allocation5 + $0x820] sm:$0xff]
    %v425 = vld [vmem:[#allocation5 + $0x828] sm:$0xff]
    %v426 = vld [vmem:[#allocation5 + $0x830] sm:$0xf]
    %v427 = vld [vmem:[#allocation5 + $0x834] sm:$0xff]
    %v428 = vld [vmem:[#allocation5 + $0x83c] sm:$0xff]
    %v429 = vld [vmem:[#allocation5 + $0x844] sm:$0xf]
    %v430 = vld [vmem:[#allocation5 + $0x848] sm:$0xff]
    %v431 = vld [vmem:[#allocation5 + $0x850] sm:$0xff]
    %v432 = vld [vmem:[#allocation5 + $0x858] sm:$0xf]
    %v433 = vld [vmem:[#allocation5 + $0x85c] sm:$0xff]
    %v434 = vld [vmem:[#allocation5 + $0x864] sm:$0xff]
    %v435 = vld [vmem:[#allocation5 + $0x86c] sm:$0xf]
    %v436 = vld [vmem:[#allocation5 + $0x870] sm:$0xff]
    %v437 = vld [vmem:[#allocation5 + $0x878] sm:$0xff]
    %v438 = vld [vmem:[#allocation5 + $0x880] sm:$0xf]
    %v439 = vld [vmem:[#allocation5 + $0x884] sm:$0xff]
    %v440 = vld [vmem:[#allocation5 + $0x88c] sm:$0xff]
    %v441 = vld [vmem:[#allocation5 + $0x894] sm:$0xf]
    %v442 = vld [vmem:[#allocation5 + $0x898] sm:$0xff]
    %v443 = vld [vmem:[#allocation5 + $0x8a0] sm:$0xff]
    %v444 = vld [vmem:[#allocation5 + $0x8a8] sm:$0xf]
    %v445 = vld [vmem:[#allocation5 + $0x8ac] sm:$0xff]
    %v446 = vld [vmem:[#allocation5 + $0x8b4] sm:$0xff]
    %v447 = vld [vmem:[#allocation5 + $0x8bc] sm:$0xf]
    %v448 = vld [vmem:[#allocation5 + $0x8c0] sm:$0xff]
    %v449 = vld [vmem:[#allocation5 + $0x8c8] sm:$0xff]
    %v450 = vld [vmem:[#allocation5 + $0x8d0] sm:$0xf]
    %v451 = vld [vmem:[#allocation5 + $0x8d4] sm:$0xff]
    %v452 = vld [vmem:[#allocation5 + $0x8dc] sm:$0xff]
    %v453 = vld [vmem:[#allocation5 + $0x8e4] sm:$0xf]
    %v454 = vld [vmem:[#allocation5 + $0x8e8] sm:$0xff]
    %v455 = vld [vmem:[#allocation5 + $0x8f0] sm:$0xff]
    %v456 = vld [vmem:[#allocation5 + $0x8f8] sm:$0xf]
    %v457 = vld [vmem:[#allocation5 + $0x8fc] sm:$0xff]
    %v458 = vld [vmem:[#allocation5 + $0x904] sm:$0xff]
    %v459 = vld [vmem:[#allocation5 + $0x90c] sm:$0xf]
    %v460 = vld [vmem:[#allocation5 + $0x910] sm:$0xff]
    %v461 = vld [vmem:[#allocation5 + $0x918] sm:$0xff]
    %v462 = vld [vmem:[#allocation5 + $0x920] sm:$0xf]
    %v463 = vld [vmem:[#allocation5 + $0x924] sm:$0xff]
    %v464 = vld [vmem:[#allocation5 + $0x92c] sm:$0xff]
    %v465 = vld [vmem:[#allocation5 + $0x934] sm:$0xf]
    %v466 = vld [vmem:[#allocation5 + $0x938] sm:$0xff]
    %v467 = vld [vmem:[#allocation5 + $0x940] sm:$0xff]
    %v468 = vld [vmem:[#allocation5 + $0x948] sm:$0xf]
    %v469 = vld [vmem:[#allocation5 + $0x94c] sm:$0xff]
    %v470 = vld [vmem:[#allocation5 + $0x954] sm:$0xff]
    %v471 = vld [vmem:[#allocation5 + $0x95c] sm:$0xf]
    %v472 = vld [vmem:[#allocation5 + $0x960] sm:$0xff]
    %v473 = vld [vmem:[#allocation5 + $0x968] sm:$0xff]
    %v474 = vld [vmem:[#allocation5 + $0x970] sm:$0xf]
    %v475 = vld [vmem:[#allocation5 + $0x974] sm:$0xff]
    %v476 = vld [vmem:[#allocation5 + $0x97c] sm:$0xff]
    %v477 = vld [vmem:[#allocation5 + $0x984] sm:$0xf]
    %v478 = vld [vmem:[#allocation5 + $0x988] sm:$0xff]
    %v479 = vld [vmem:[#allocation5 + $0x990] sm:$0xff]
    %v480 = vld [vmem:[#allocation5 + $0x998] sm:$0xf]
    %v481 = vld [vmem:[#allocation5 + $0x99c] sm:$0xff]
    %v482 = vld [vmem:[#allocation5 + $0x9a4] sm:$0xff]
    %v483 = vld [vmem:[#allocation5 + $0x9ac] sm:$0xf]
    %v484 = vld [vmem:[#allocation5 + $0x9b0] sm:$0xff]
    %v485 = vld [vmem:[#allocation5 + $0x9b8] sm:$0xff]
    %v486 = vld [vmem:[#allocation5 + $0x9c0] sm:$0xf]
    %v487 = vld [vmem:[#allocation5 + $0x9c4] sm:$0xff]
    %v488 = vld [vmem:[#allocation5 + $0x9cc] sm:$0xff]
    %v489 = vld [vmem:[#allocation5 + $0x9d4] sm:$0xf]
    %v490 = vld [vmem:[#allocation5 + $0x9d8] sm:$0xff]
    %v491 = vld [vmem:[#allocation5 + $0x9e0] sm:$0xff]
    %v492 = vld [vmem:[#allocation5 + $0x9e8] sm:$0xf]
    %v493 = vld [vmem:[#allocation5 + $0x9ec] sm:$0xff]
    %v494 = vld [vmem:[#allocation5 + $0x9f4] sm:$0xff]
    %v495 = vld [vmem:[#allocation5 + $0x9fc] sm:$0xf]
    %v496 = vld [vmem:[#allocation5 + $0xa00] sm:$0xff]
    %v497 = vld [vmem:[#allocation5 + $0xa08] sm:$0xff]
    %v498 = vld [vmem:[#allocation5 + $0xa10] sm:$0xf]
    %v499 = vld [vmem:[#allocation5 + $0xa14] sm:$0xff]
    %v500 = vld [vmem:[#allocation5 + $0xa1c] sm:$0xff]
    %v501 = vld [vmem:[#allocation5 + $0xa24] sm:$0xf]
    %v502 = vld [vmem:[#allocation5 + $0xa28] sm:$0xff]
    %v503 = vld [vmem:[#allocation5 + $0xa30] sm:$0xff]
    %v504 = vld [vmem:[#allocation5 + $0xa38] sm:$0xf]
    %v505 = vld [vmem:[#allocation5 + $0xa3c] sm:$0xff]
    %v506 = vld [vmem:[#allocation5 + $0xa44] sm:$0xff]
    %v507 = vld [vmem:[#allocation5 + $0xa4c] sm:$0xf]
    %v508 = vld [vmem:[#allocation5 + $0xa50] sm:$0xff]
    %v509 = vld [vmem:[#allocation5 + $0xa58] sm:$0xff]
    %v510 = vld [vmem:[#allocation5 + $0xa60] sm:$0xf]
    %v511 = vld [vmem:[#allocation5 + $0xa64] sm:$0xff]
    %v512 = vld [vmem:[#allocation5 + $0xa6c] sm:$0xff]
    %v513 = vld [vmem:[#allocation5 + $0xa74] sm:$0xf]
    %v514 = vld [vmem:[#allocation5 + $0xa78] sm:$0xff]
    %v515 = vld [vmem:[#allocation5 + $0xa80] sm:$0xff]
    %v516 = vld [vmem:[#allocation5 + $0xa88] sm:$0xf]
    %v517 = vld [vmem:[#allocation5 + $0xa8c] sm:$0xff]
    %v518 = vld [vmem:[#allocation5 + $0xa94] sm:$0xff]
    %v519 = vld [vmem:[#allocation5 + $0xa9c] sm:$0xf]
    %v520 = vld [vmem:[#allocation5 + $0xaa0] sm:$0xff]
    %v521 = vld [vmem:[#allocation5 + $0xaa8] sm:$0xff]
    %v522 = vld [vmem:[#allocation5 + $0xab0] sm:$0xf]
    %v523 = vld [vmem:[#allocation5 + $0xab4] sm:$0xff]
    %v524 = vld [vmem:[#allocation5 + $0xabc] sm:$0xff]
    %v525 = vld [vmem:[#allocation5 + $0xac4] sm:$0xf]
    %v526 = vld [vmem:[#allocation5 + $0xac8] sm:$0xff]
    %v527 = vld [vmem:[#allocation5 + $0xad0] sm:$0xff]
    %v528 = vld [vmem:[#allocation5 + $0xad8] sm:$0xf]
    %v529 = vld [vmem:[#allocation5 + $0xadc] sm:$0xff]
    %v530 = vld [vmem:[#allocation5 + $0xae4] sm:$0xff]
    %v531 = vld [vmem:[#allocation5 + $0xaec] sm:$0xf]
    %v532 = vld [vmem:[#allocation5 + $0xaf0] sm:$0xff]
    %v533 = vld [vmem:[#allocation5 + $0xaf8] sm:$0xff]
    %v534 = vld [vmem:[#allocation5 + $0xb00] sm:$0xf]
    %v535 = vld [vmem:[#allocation5 + $0xb04] sm:$0x77]
    %v536 = vld [vmem:[#allocation5 + $0xb0c] sm:$0x77]
    %v537 = vld [vmem:[#allocation5 + $0xb14] sm:$0x7]
    %v538 = vld [vmem:[#allocation7] sm:$0x1f]
    %v540 = vperm.slane %v538, 0
    %v541 = vperm.slane %v538, 1
    %v542 = vperm.slane %v538, 2
    %v543 = vperm.slane %v538, 3
    %v544 = vperm.slane %v538, 4
    %v976 = vunpack.c.l.b16 %v112
    %v977 = vunpack.c.h.b16 %v112
    %v978 = vunpack.c.l.b16 %v113
    %v979 = vunpack.c.h.b16 %v113
    %v980 = vunpack.c.l.b16 %v114
    %v981 = vunpack.c.l.b16 %v115
    %v982 = vunpack.c.h.b16 %v115
    %v983 = vunpack.c.l.b16 %v116
    %v984 = vunpack.c.h.b16 %v116
    %v985 = vunpack.c.l.b16 %v117
    %v986 = vunpack.c.l.b16 %v118
    %v987 = vunpack.c.h.b16 %v118
    %v988 = vunpack.c.l.b16 %v119
    %v989 = vunpack.c.h.b16 %v119
    %v990 = vunpack.c.l.b16 %v120
    %v991 = vunpack.c.l.b16 %v121
    %v992 = vunpack.c.h.b16 %v121
    %v993 = vunpack.c.l.b16 %v122
    %v994 = vunpack.c.h.b16 %v122
    %v995 = vunpack.c.l.b16 %v123
    %v996 = vunpack.c.l.b16 %v124
    %v997 = vunpack.c.h.b16 %v124
    %v998 = vunpack.c.l.b16 %v125
    %v999 = vunpack.c.h.b16 %v125
    %v1000 = vunpack.c.l.b16 %v126
    %v1001 = vunpack.c.l.b16 %v127
    %v1002 = vunpack.c.h.b16 %v127
    %v1003 = vunpack.c.l.b16 %v128
    %v1004 = vunpack.c.h.b16 %v128
    %v1005 = vunpack.c.l.b16 %v129
    %v1006 = vunpack.c.l.b16 %v130
    %v1007 = vunpack.c.h.b16 %v130
    %v1008 = vunpack.c.l.b16 %v131
    %v1009 = vunpack.c.h.b16 %v131
    %v1010 = vunpack.c.l.b16 %v132
    %v1011 = vunpack.c.l.b16 %v133
    %v1012 = vunpack.c.h.b16 %v133
    %v1013 = vunpack.c.l.b16 %v134
    %v1014 = vunpack.c.h.b16 %v134
    %v1015 = vunpack.c.l.b16 %v135
    %v1016 = vunpack.c.l.b16 %v136
    %v1017 = vunpack.c.h.b16 %v136
    %v1018 = vunpack.c.l.b16 %v137
    %v1019 = vunpack.c.h.b16 %v137
    %v1020 = vunpack.c.l.b16 %v138
    %v1021 = vunpack.c.l.b16 %v139
    %v1022 = vunpack.c.h.b16 %v139
    %v1023 = vunpack.c.l.b16 %v140
    %v1024 = vunpack.c.h.b16 %v140
    %v1025 = vunpack.c.l.b16 %v141
    %v1026 = vunpack.c.l.b16 %v142
    %v1027 = vunpack.c.h.b16 %v142
    %v1028 = vunpack.c.l.b16 %v143
    %v1029 = vunpack.c.h.b16 %v143
    %v1030 = vunpack.c.l.b16 %v144
    %v1031 = vunpack.c.l.b16 %v145
    %v1032 = vunpack.c.h.b16 %v145
    %v1033 = vunpack.c.l.b16 %v146
    %v1034 = vunpack.c.h.b16 %v146
    %v1035 = vunpack.c.l.b16 %v147
    %v1036 = vunpack.c.l.b16 %v148
    %v1037 = vunpack.c.h.b16 %v148
    %v1038 = vunpack.c.l.b16 %v149
    %v1039 = vunpack.c.h.b16 %v149
    %v1040 = vunpack.c.l.b16 %v150
    %v1041 = vunpack.c.l.b16 %v151
    %v1042 = vunpack.c.h.b16 %v151
    %v1043 = vunpack.c.l.b16 %v152
    %v1044 = vunpack.c.h.b16 %v152
    %v1045 = vunpack.c.l.b16 %v153
    %v1046 = vunpack.c.l.b16 %v154
    %v1047 = vunpack.c.h.b16 %v154
    %v1048 = vunpack.c.l.b16 %v155
    %v1049 = vunpack.c.h.b16 %v155
    %v1050 = vunpack.c.l.b16 %v156
    %v1051 = vunpack.c.l.b16 %v157
    %v1052 = vunpack.c.h.b16 %v157
    %v1053 = vunpack.c.l.b16 %v158
    %v1054 = vunpack.c.h.b16 %v158
    %v1055 = vunpack.c.l.b16 %v159
    %v1056 = vunpack.c.l.b16 %v160
    %v1057 = vunpack.c.h.b16 %v160
    %v1058 = vunpack.c.l.b16 %v161
    %v1059 = vunpack.c.h.b16 %v161
    %v1060 = vunpack.c.l.b16 %v162
    %v1061 = vunpack.c.l.b16 %v163
    %v1062 = vunpack.c.h.b16 %v163
    %v1063 = vunpack.c.l.b16 %v164
    %v1064 = vunpack.c.h.b16 %v164
    %v1065 = vunpack.c.l.b16 %v165
    %v1066 = vunpack.c.l.b16 %v166
    %v1067 = vunpack.c.h.b16 %v166
    %v1068 = vunpack.c.l.b16 %v167
    %v1069 = vunpack.c.h.b16 %v167
    %v1070 = vunpack.c.l.b16 %v168
    %v1071 = vunpack.c.l.b16 %v169
    %v1072 = vunpack.c.h.b16 %v169
    %v1073 = vunpack.c.l.b16 %v170
    %v1074 = vunpack.c.h.b16 %v170
    %v1075 = vunpack.c.l.b16 %v171
    %v1076 = vunpack.c.l.b16 %v172
    %v1077 = vunpack.c.h.b16 %v172
    %v1078 = vunpack.c.l.b16 %v173
    %v1079 = vunpack.c.h.b16 %v173
    %v1080 = vunpack.c.l.b16 %v174
    %v1081 = vunpack.c.l.b16 %v175
    %v1082 = vunpack.c.h.b16 %v175
    %v1083 = vunpack.c.l.b16 %v176
    %v1084 = vunpack.c.h.b16 %v176
    %v1085 = vunpack.c.l.b16 %v177
    %v1086 = vunpack.c.l.b16 %v178
    %v1087 = vunpack.c.h.b16 %v178
    %v1088 = vunpack.c.l.b16 %v179
    %v1089 = vunpack.c.h.b16 %v179
    %v1090 = vunpack.c.l.b16 %v180
    %v1091 = vunpack.c.l.b16 %v181
    %v1092 = vunpack.c.h.b16 %v181
    %v1093 = vunpack.c.l.b16 %v182
    %v1094 = vunpack.c.h.b16 %v182
    %v1095 = vunpack.c.l.b16 %v183
    %v1096 = vunpack.c.l.b16 %v184
    %v1097 = vunpack.c.h.b16 %v184
    %v1098 = vunpack.c.l.b16 %v185
    %v1099 = vunpack.c.h.b16 %v185
    %v1100 = vunpack.c.l.b16 %v186
    %v1101 = vunpack.c.l.b16 %v187
    %v1102 = vunpack.c.h.b16 %v187
    %v1103 = vunpack.c.l.b16 %v188
    %v1104 = vunpack.c.h.b16 %v188
    %v1105 = vunpack.c.l.b16 %v189
    %v1106 = vunpack.c.l.b16 %v190
    %v1107 = vunpack.c.h.b16 %v190
    %v1108 = vunpack.c.l.b16 %v191
    %v1109 = vunpack.c.h.b16 %v191
    %v1110 = vunpack.c.l.b16 %v192
    %v1111 = vunpack.c.l.b16 %v193
    %v1112 = vunpack.c.h.b16 %v193
    %v1113 = vunpack.c.l.b16 %v194
    %v1114 = vunpack.c.h.b16 %v194
    %v1115 = vunpack.c.l.b16 %v195
    %v1116 = vunpack.c.l.b16 %v196
    %v1117 = vunpack.c.h.b16 %v196
    %v1118 = vunpack.c.l.b16 %v197
    %v1119 = vunpack.c.h.b16 %v197
    %v1120 = vunpack.c.l.b16 %v198
    %v1121 = vunpack.c.l.b16 %v199
    %v1122 = vunpack.c.h.b16 %v199
    %v1123 = vunpack.c.l.b16 %v200
    %v1124 = vunpack.c.h.b16 %v200
    %v1125 = vunpack.c.l.b16 %v201
    %v1126 = vunpack.c.l.b16 %v202
    %v1127 = vunpack.c.h.b16 %v202
    %v1128 = vunpack.c.l.b16 %v203
    %v1129 = vunpack.c.h.b16 %v203
    %v1130 = vunpack.c.l.b16 %v204
    %v1131 = vunpack.c.l.b16 %v205
    %v1132 = vunpack.c.h.b16 %v205
    %v1133 = vunpack.c.l.b16 %v206
    %v1134 = vunpack.c.h.b16 %v206
    %v1135 = vunpack.c.l.b16 %v207
    %v1136 = vunpack.c.l.b16 %v208
    %v1137 = vunpack.c.h.b16 %v208
    %v1138 = vunpack.c.l.b16 %v209
    %v1139 = vunpack.c.h.b16 %v209
    %v1140 = vunpack.c.l.b16 %v210
    %v1141 = vunpack.c.l.b16 %v211
    %v1142 = vunpack.c.h.b16 %v211
    %v1143 = vunpack.c.l.b16 %v212
    %v1144 = vunpack.c.h.b16 %v212
    %v1145 = vunpack.c.l.b16 %v213
    %v1146 = vunpack.c.l.b16 %v214
    %v1147 = vunpack.c.h.b16 %v214
    %v1148 = vunpack.c.l.b16 %v215
    %v1149 = vunpack.c.h.b16 %v215
    %v1150 = vunpack.c.l.b16 %v216
    %v1151 = vunpack.c.l.b16 %v217
    %v1152 = vunpack.c.h.b16 %v217
    %v1153 = vunpack.c.l.b16 %v218
    %v1154 = vunpack.c.h.b16 %v218
    %v1155 = vunpack.c.l.b16 %v219
    %v1156 = vunpack.c.l.b16 %v220
    %v1157 = vunpack.c.h.b16 %v220
    %v1158 = vunpack.c.l.b16 %v221
    %v1159 = vunpack.c.h.b16 %v221
    %v1160 = vunpack.c.l.b16 %v222
    %v1161 = vunpack.c.l.b16 %v223
    %v1162 = vunpack.c.h.b16 %v223
    %v1163 = vunpack.c.l.b16 %v224
    %v1164 = vunpack.c.h.b16 %v224
    %v1165 = vunpack.c.l.b16 %v225
    %v1166 = vunpack.c.l.b16 %v226
    %v1167 = vunpack.c.h.b16 %v226
    %v1168 = vunpack.c.l.b16 %v227
    %v1169 = vunpack.c.h.b16 %v227
    %v1170 = vunpack.c.l.b16 %v228
    %v1171 = vunpack.c.l.b16 %v229
    %v1172 = vunpack.c.h.b16 %v229
    %v1173 = vunpack.c.l.b16 %v230
    %v1174 = vunpack.c.h.b16 %v230
    %v1175 = vunpack.c.l.b16 %v231
    %v1176 = vunpack.c.l.b16 %v232
    %v1177 = vunpack.c.h.b16 %v232
    %v1178 = vunpack.c.l.b16 %v233
    %v1179 = vunpack.c.h.b16 %v233
    %v1180 = vunpack.c.l.b16 %v234
    %v1181 = vunpack.c.l.b16 %v235
    %v1182 = vunpack.c.h.b16 %v235
    %v1183 = vunpack.c.l.b16 %v236
    %v1184 = vunpack.c.h.b16 %v236
    %v1185 = vunpack.c.l.b16 %v237
    %v1186 = vunpack.c.l.b16 %v238
    %v1187 = vunpack.c.h.b16 %v238
    %v1188 = vunpack.c.l.b16 %v239
    %v1189 = vunpack.c.h.b16 %v239
    %v1190 = vunpack.c.l.b16 %v240
    %v1191 = vunpack.c.l.b16 %v241
    %v1192 = vunpack.c.h.b16 %v241
    %v1193 = vunpack.c.l.b16 %v242
    %v1194 = vunpack.c.h.b16 %v242
    %v1195 = vunpack.c.l.b16 %v243
    %v1196 = vunpack.c.l.b16 %v244
    %v1197 = vunpack.c.h.b16 %v244
    %v1198 = vunpack.c.l.b16 %v245
    %v1199 = vunpack.c.h.b16 %v245
    %v1200 = vunpack.c.l.b16 %v246
    %v1201 = vunpack.c.l.b16 %v247
    %v1202 = vunpack.c.h.b16 %v247
    %v1203 = vunpack.c.l.b16 %v248
    %v1204 = vunpack.c.h.b16 %v248
    %v1205 = vunpack.c.l.b16 %v249
    %v1206 = vunpack.c.l.b16 %v250
    %v1207 = vunpack.c.h.b16 %v250
    %v1208 = vunpack.c.l.b16 %v251
    %v1209 = vunpack.c.h.b16 %v251
    %v1210 = vunpack.c.l.b16 %v252
    %v1211 = vunpack.c.l.b16 %v253
    %v1212 = vunpack.c.h.b16 %v253
    %v1213 = vunpack.c.l.b16 %v254
    %v1214 = vunpack.c.h.b16 %v254
    %v1215 = vunpack.c.l.b16 %v255
    %v1216 = vunpack.c.l.b16 %v256
    %v1217 = vunpack.c.h.b16 %v256
    %v1218 = vunpack.c.l.b16 %v257
    %v1219 = vunpack.c.h.b16 %v257
    %v1220 = vunpack.c.l.b16 %v258
    %v1221 = vunpack.c.l.b16 %v259
    %v1222 = vunpack.c.h.b16 %v259
    %v1223 = vunpack.c.l.b16 %v260
    %v1224 = vunpack.c.h.b16 %v260
    %v1225 = vunpack.c.l.b16 %v261
    %v1226 = vunpack.c.l.b16 %v262
    %v1227 = vunpack.c.h.b16 %v262
    %v1228 = vunpack.c.l.b16 %v263
    %v1229 = vunpack.c.h.b16 %v263
    %v1230 = vunpack.c.l.b16 %v264
    %v1231 = vunpack.c.l.b16 %v265
    %v1232 = vunpack.c.h.b16 %v265
    %v1233 = vunpack.c.l.b16 %v266
    %v1234 = vunpack.c.h.b16 %v266
    %v1235 = vunpack.c.l.b16 %v267
    %v1236 = vunpack.c.l.b16 %v268
    %v1237 = vunpack.c.h.b16 %v268
    %v1238 = vunpack.c.l.b16 %v269
    %v1239 = vunpack.c.h.b16 %v269
    %v1240 = vunpack.c.l.b16 %v270
    %v1241 = vunpack.c.l.b16 %v271
    %v1242 = vunpack.c.h.b16 %v271
    %v1243 = vunpack.c.l.b16 %v272
    %v1244 = vunpack.c.h.b16 %v272
    %v1245 = vunpack.c.l.b16 %v273
    %v1246 = vunpack.c.l.b16 %v274
    %v1247 = vunpack.c.h.b16 %v274
    %v1248 = vunpack.c.l.b16 %v275
    %v1249 = vunpack.c.h.b16 %v275
    %v1250 = vunpack.c.l.b16 %v276
    %v1251 = vunpack.c.l.b16 %v277
    %v1252 = vunpack.c.h.b16 %v277
    %v1253 = vunpack.c.l.b16 %v278
    %v1254 = vunpack.c.h.b16 %v278
    %v1255 = vunpack.c.l.b16 %v279
    %v1256 = vunpack.c.l.b16 %v280
    %v1257 = vunpack.c.h.b16 %v280
    %v1258 = vunpack.c.l.b16 %v281
    %v1259 = vunpack.c.h.b16 %v281
    %v1260 = vunpack.c.l.b16 %v282
    %v1261 = vunpack.c.l.b16 %v283
    %v1262 = vunpack.c.h.b16 %v283
    %v1263 = vunpack.c.l.b16 %v284
    %v1264 = vunpack.c.h.b16 %v284
    %v1265 = vunpack.c.l.b16 %v285
    %v1266 = vunpack.c.l.b16 %v286
    %v1267 = vunpack.c.h.b16 %v286
    %v1268 = vunpack.c.l.b16 %v287
    %v1269 = vunpack.c.h.b16 %v287
    %v1270 = vunpack.c.l.b16 %v288
    %v1271 = vunpack.c.l.b16 %v289
    %v1272 = vunpack.c.h.b16 %v289
    %v1273 = vunpack.c.l.b16 %v290
    %v1274 = vunpack.c.h.b16 %v290
    %v1275 = vunpack.c.l.b16 %v291
    %v1276 = vunpack.c.l.b16 %v292
    %v1277 = vunpack.c.h.b16 %v292
    %v1278 = vunpack.c.l.b16 %v293
    %v1279 = vunpack.c.h.b16 %v293
    %v1280 = vunpack.c.l.b16 %v294
    %v1281 = vunpack.c.l.b16 %v295
    %v1282 = vunpack.c.h.b16 %v295
    %v1283 = vunpack.c.l.b16 %v296
    %v1284 = vunpack.c.h.b16 %v296
    %v1285 = vunpack.c.l.b16 %v297
    %v1286 = vunpack.c.l.b16 %v298
    %v1287 = vunpack.c.h.b16 %v298
    %v1288 = vunpack.c.l.b16 %v299
    %v1289 = vunpack.c.h.b16 %v299
    %v1290 = vunpack.c.l.b16 %v300
    %v1291 = vunpack.c.l.b16 %v301
    %v1292 = vunpack.c.h.b16 %v301
    %v1293 = vunpack.c.l.b16 %v302
    %v1294 = vunpack.c.h.b16 %v302
    %v1295 = vunpack.c.l.b16 %v303
    %v1296 = vunpack.c.l.b16 %v304
    %v1297 = vunpack.c.h.b16 %v304
    %v1298 = vunpack.c.l.b16 %v305
    %v1299 = vunpack.c.h.b16 %v305
    %v1300 = vunpack.c.l.b16 %v306
    %v1301 = vunpack.c.l.b16 %v307
    %v1302 = vunpack.c.h.b16 %v307
    %v1303 = vunpack.c.l.b16 %v308
    %v1304 = vunpack.c.h.b16 %v308
    %v1305 = vunpack.c.l.b16 %v309
    %v1306 = vunpack.c.l.b16 %v310
    %v1307 = vunpack.c.h.b16 %v310
    %v1308 = vunpack.c.l.b16 %v311
    %v1309 = vunpack.c.h.b16 %v311
    %v1310 = vunpack.c.l.b16 %v312
    %v1311 = vunpack.c.l.b16 %v313
    %v1312 = vunpack.c.h.b16 %v313
    %v1313 = vunpack.c.l.b16 %v314
    %v1314 = vunpack.c.h.b16 %v314
    %v1315 = vunpack.c.l.b16 %v315
    %v1316 = vunpack.c.l.b16 %v316
    %v1317 = vunpack.c.h.b16 %v316
    %v1318 = vunpack.c.l.b16 %v317
    %v1319 = vunpack.c.h.b16 %v317
    %v1320 = vunpack.c.l.b16 %v318
    %v1321 = vunpack.c.l.b16 %v319
    %v1322 = vunpack.c.h.b16 %v319
    %v1323 = vunpack.c.l.b16 %v320
    %v1324 = vunpack.c.h.b16 %v320
    %v1325 = vunpack.c.l.b16 %v321
    %v1326 = vunpack.c.l.b16 %v322
    %v1327 = vunpack.c.h.b16 %v322
    %v1328 = vunpack.c.l.b16 %v323
    %v1329 = vunpack.c.h.b16 %v323
    %v1330 = vunpack.c.l.b16 %v324
    %v1331 = vunpack.c.l.b16 %v325
    %v1332 = vunpack.c.h.b16 %v325
    %v1333 = vunpack.c.l.b16 %v326
    %v1334 = vunpack.c.h.b16 %v326
    %v1335 = vunpack.c.l.b16 %v327
    %v1336 = vunpack.c.l.b16 %v328
    %v1337 = vunpack.c.h.b16 %v328
    %v1338 = vunpack.c.l.b16 %v329
    %v1339 = vunpack.c.h.b16 %v329
    %v1340 = vunpack.c.l.b16 %v330
    %v1341 = vunpack.c.l.b16 %v331
    %v1342 = vunpack.c.h.b16 %v331
    %v1343 = vunpack.c.l.b16 %v332
    %v1344 = vunpack.c.h.b16 %v332
    %v1345 = vunpack.c.l.b16 %v333
    %v1346 = vunpack.c.l.b16 %v334
    %v1347 = vunpack.c.h.b16 %v334
    %v1348 = vunpack.c.l.b16 %v335
    %v1349 = vunpack.c.h.b16 %v335
    %v1350 = vunpack.c.l.b16 %v336
    %v1351 = vunpack.c.l.b16 %v337
    %v1352 = vunpack.c.h.b16 %v337
    %v1353 = vunpack.c.l.b16 %v338
    %v1354 = vunpack.c.h.b16 %v338
    %v1355 = vunpack.c.l.b16 %v339
    %v1356 = vunpack.c.l.b16 %v340
    %v1357 = vunpack.c.h.b16 %v340
    %v1358 = vunpack.c.l.b16 %v341
    %v1359 = vunpack.c.h.b16 %v341
    %v1360 = vunpack.c.l.b16 %v342
    %v1361 = vunpack.c.l.b16 %v343
    %v1362 = vunpack.c.h.b16 %v343
    %v1363 = vunpack.c.l.b16 %v344
    %v1364 = vunpack.c.h.b16 %v344
    %v1365 = vunpack.c.l.b16 %v345
    %v1366 = vunpack.c.l.b16 %v346
    %v1367 = vunpack.c.h.b16 %v346
    %v1368 = vunpack.c.l.b16 %v347
    %v1369 = vunpack.c.h.b16 %v347
    %v1370 = vunpack.c.l.b16 %v348
    %v1371 = vunpack.c.l.b16 %v349
    %v1372 = vunpack.c.h.b16 %v349
    %v1373 = vunpack.c.l.b16 %v350
    %v1374 = vunpack.c.h.b16 %v350
    %v1375 = vunpack.c.l.b16 %v351
    %v1376 = vunpack.c.l.b16 %v352
    %v1377 = vunpack.c.h.b16 %v352
    %v1378 = vunpack.c.l.b16 %v353
    %v1379 = vunpack.c.h.b16 %v353
    %v1380 = vunpack.c.l.b16 %v354
    %v1381 = vunpack.c.l.b16 %v355
    %v1382 = vunpack.c.h.b16 %v355
    %v1383 = vunpack.c.l.b16 %v356
    %v1384 = vunpack.c.h.b16 %v356
    %v1385 = vunpack.c.l.b16 %v357
    %v1386 = vunpack.c.l.b16 %v358
    %v1387 = vunpack.c.h.b16 %v358
    %v1388 = vunpack.c.l.b16 %v359
    %v1389 = vunpack.c.h.b16 %v359
    %v1390 = vunpack.c.l.b16 %v360
    %v1391 = vunpack.c.l.b16 %v361
    %v1392 = vunpack.c.h.b16 %v361
    %v1393 = vunpack.c.l.b16 %v362
    %v1394 = vunpack.c.h.b16 %v362
    %v1395 = vunpack.c.l.b16 %v363
    %v1396 = vunpack.c.l.b16 %v364
    %v1397 = vunpack.c.h.b16 %v364
    %v1398 = vunpack.c.l.b16 %v365
    %v1399 = vunpack.c.h.b16 %v365
    %v1400 = vunpack.c.l.b16 %v366
    %v1401 = vunpack.c.l.b16 %v367
    %v1402 = vunpack.c.h.b16 %v367
    %v1403 = vunpack.c.l.b16 %v368
    %v1404 = vunpack.c.h.b16 %v368
    %v1405 = vunpack.c.l.b16 %v369
    %v1406 = vunpack.c.l.b16 %v370
    %v1407 = vunpack.c.h.b16 %v370
    %v1408 = vunpack.c.l.b16 %v371
    %v1409 = vunpack.c.h.b16 %v371
    %v1410 = vunpack.c.l.b16 %v372
    %v1411 = vunpack.c.l.b16 %v373
    %v1412 = vunpack.c.h.b16 %v373
    %v1413 = vunpack.c.l.b16 %v374
    %v1414 = vunpack.c.h.b16 %v374
    %v1415 = vunpack.c.l.b16 %v375
    %v1416 = vunpack.c.l.b16 %v376
    %v1417 = vunpack.c.h.b16 %v376
    %v1418 = vunpack.c.l.b16 %v377
    %v1419 = vunpack.c.h.b16 %v377
    %v1420 = vunpack.c.l.b16 %v378
    %v1421 = vunpack.c.l.b16 %v379
    %v1422 = vunpack.c.h.b16 %v379
    %v1423 = vunpack.c.l.b16 %v380
    %v1424 = vunpack.c.h.b16 %v380
    %v1425 = vunpack.c.l.b16 %v381
    %v1426 = vunpack.c.l.b16 %v382
    %v1427 = vunpack.c.h.b16 %v382
    %v1428 = vunpack.c.l.b16 %v383
    %v1429 = vunpack.c.h.b16 %v383
    %v1430 = vunpack.c.l.b16 %v384
    %v1431 = vunpack.c.l.b16 %v385
    %v1432 = vunpack.c.h.b16 %v385
    %v1433 = vunpack.c.l.b16 %v386
    %v1434 = vunpack.c.h.b16 %v386
    %v1435 = vunpack.c.l.b16 %v387
    %v1436 = vunpack.c.l.b16 %v388
    %v1437 = vunpack.c.h.b16 %v388
    %v1438 = vunpack.c.l.b16 %v389
    %v1439 = vunpack.c.h.b16 %v389
    %v1440 = vunpack.c.l.b16 %v390
    %v1441 = vunpack.c.l.b16 %v391
    %v1442 = vunpack.c.h.b16 %v391
    %v1443 = vunpack.c.l.b16 %v392
    %v1444 = vunpack.c.h.b16 %v392
    %v1445 = vunpack.c.l.b16 %v393
    %v1446 = vunpack.c.l.b16 %v394
    %v1447 = vunpack.c.h.b16 %v394
    %v1448 = vunpack.c.l.b16 %v395
    %v1449 = vunpack.c.h.b16 %v395
    %v1450 = vunpack.c.l.b16 %v396
    %v1451 = vunpack.c.l.b16 %v397
    %v1452 = vunpack.c.h.b16 %v397
    %v1453 = vunpack.c.l.b16 %v398
    %v1454 = vunpack.c.h.b16 %v398
    %v1455 = vunpack.c.l.b16 %v399
    %v1456 = vunpack.c.l.b16 %v400
    %v1457 = vunpack.c.h.b16 %v400
    %v1458 = vunpack.c.l.b16 %v401
    %v1459 = vunpack.c.h.b16 %v401
    %v1460 = vunpack.c.l.b16 %v402
    %v1461 = vunpack.c.l.b16 %v403
    %v1462 = vunpack.c.h.b16 %v403
    %v1463 = vunpack.c.l.b16 %v404
    %v1464 = vunpack.c.h.b16 %v404
    %v1465 = vunpack.c.l.b16 %v405
    %v1466 = vunpack.c.l.b16 %v406
    %v1467 = vunpack.c.h.b16 %v406
    %v1468 = vunpack.c.l.b16 %v407
    %v1469 = vunpack.c.h.b16 %v407
    %v1470 = vunpack.c.l.b16 %v408
    %v1471 = vunpack.c.l.b16 %v409
    %v1472 = vunpack.c.h.b16 %v409
    %v1473 = vunpack.c.l.b16 %v410
    %v1474 = vunpack.c.h.b16 %v410
    %v1475 = vunpack.c.l.b16 %v411
    %v1476 = vunpack.c.l.b16 %v412
    %v1477 = vunpack.c.h.b16 %v412
    %v1478 = vunpack.c.l.b16 %v413
    %v1479 = vunpack.c.h.b16 %v413
    %v1480 = vunpack.c.l.b16 %v414
    %v1481 = vunpack.c.l.b16 %v415
    %v1482 = vunpack.c.h.b16 %v415
    %v1483 = vunpack.c.l.b16 %v416
    %v1484 = vunpack.c.h.b16 %v416
    %v1485 = vunpack.c.l.b16 %v417
    %v1486 = vunpack.c.l.b16 %v418
    %v1487 = vunpack.c.h.b16 %v418
    %v1488 = vunpack.c.l.b16 %v419
    %v1489 = vunpack.c.h.b16 %v419
    %v1490 = vunpack.c.l.b16 %v420
    %v1491 = vunpack.c.l.b16 %v421
    %v1492 = vunpack.c.h.b16 %v421
    %v1493 = vunpack.c.l.b16 %v422
    %v1494 = vunpack.c.h.b16 %v422
    %v1495 = vunpack.c.l.b16 %v423
    %v1496 = vunpack.c.l.b16 %v424
    %v1497 = vunpack.c.h.b16 %v424
    %v1498 = vunpack.c.l.b16 %v425
    %v1499 = vunpack.c.h.b16 %v425
    %v1500 = vunpack.c.l.b16 %v426
    %v1501 = vunpack.c.l.b16 %v427
    %v1502 = vunpack.c.h.b16 %v427
    %v1503 = vunpack.c.l.b16 %v428
    %v1504 = vunpack.c.h.b16 %v428
    %v1505 = vunpack.c.l.b16 %v429
    %v1506 = vunpack.c.l.b16 %v430
    %v1507 = vunpack.c.h.b16 %v430
    %v1508 = vunpack.c.l.b16 %v431
    %v1509 = vunpack.c.h.b16 %v431
    %v1510 = vunpack.c.l.b16 %v432
    %v1511 = vunpack.c.l.b16 %v433
    %v1512 = vunpack.c.h.b16 %v433
    %v1513 = vunpack.c.l.b16 %v434
    %v1514 = vunpack.c.h.b16 %v434
    %v1515 = vunpack.c.l.b16 %v435
    %v1516 = vunpack.c.l.b16 %v436
    %v1517 = vunpack.c.h.b16 %v436
    %v1518 = vunpack.c.l.b16 %v437
    %v1519 = vunpack.c.h.b16 %v437
    %v1520 = vunpack.c.l.b16 %v438
    %v1521 = vunpack.c.l.b16 %v439
    %v1522 = vunpack.c.h.b16 %v439
    %v1523 = vunpack.c.l.b16 %v440
    %v1524 = vunpack.c.h.b16 %v440
    %v1525 = vunpack.c.l.b16 %v441
    %v1526 = vunpack.c.l.b16 %v442
    %v1527 = vunpack.c.h.b16 %v442
    %v1528 = vunpack.c.l.b16 %v443
    %v1529 = vunpack.c.h.b16 %v443
    %v1530 = vunpack.c.l.b16 %v444
    %v1531 = vunpack.c.l.b16 %v445
    %v1532 = vunpack.c.h.b16 %v445
    %v1533 = vunpack.c.l.b16 %v446
    %v1534 = vunpack.c.h.b16 %v446
    %v1535 = vunpack.c.l.b16 %v447
    %v1536 = vunpack.c.l.b16 %v448
    %v1537 = vunpack.c.h.b16 %v448
    %v1538 = vunpack.c.l.b16 %v449
    %v1539 = vunpack.c.h.b16 %v449
    %v1540 = vunpack.c.l.b16 %v450
    %v1541 = vunpack.c.l.b16 %v451
    %v1542 = vunpack.c.h.b16 %v451
    %v1543 = vunpack.c.l.b16 %v452
    %v1544 = vunpack.c.h.b16 %v452
    %v1545 = vunpack.c.l.b16 %v453
    %v1546 = vunpack.c.l.b16 %v454
    %v1547 = vunpack.c.h.b16 %v454
    %v1548 = vunpack.c.l.b16 %v455
    %v1549 = vunpack.c.h.b16 %v455
    %v1550 = vunpack.c.l.b16 %v456
    %v1551 = vunpack.c.l.b16 %v457
    %v1552 = vunpack.c.h.b16 %v457
    %v1553 = vunpack.c.l.b16 %v458
    %v1554 = vunpack.c.h.b16 %v458
    %v1555 = vunpack.c.l.b16 %v459
    %v1556 = vunpack.c.l.b16 %v460
    %v1557 = vunpack.c.h.b16 %v460
    %v1558 = vunpack.c.l.b16 %v461
    %v1559 = vunpack.c.h.b16 %v461
    %v1560 = vunpack.c.l.b16 %v462
    %v1561 = vunpack.c.l.b16 %v463
    %v1562 = vunpack.c.h.b16 %v463
    %v1563 = vunpack.c.l.b16 %v464
    %v1564 = vunpack.c.h.b16 %v464
    %v1565 = vunpack.c.l.b16 %v465
    %v1566 = vunpack.c.l.b16 %v466
    %v1567 = vunpack.c.h.b16 %v466
    %v1568 = vunpack.c.l.b16 %v467
    %v1569 = vunpack.c.h.b16 %v467
    %v1570 = vunpack.c.l.b16 %v468
    %v1571 = vunpack.c.l.b16 %v469
    %v1572 = vunpack.c.h.b16 %v469
    %v1573 = vunpack.c.l.b16 %v470
    %v1574 = vunpack.c.h.b16 %v470
    %v1575 = vunpack.c.l.b16 %v471
    %v1576 = vunpack.c.l.b16 %v472
    %v1577 = vunpack.c.h.b16 %v472
    %v1578 = vunpack.c.l.b16 %v473
    %v1579 = vunpack.c.h.b16 %v473
    %v1580 = vunpack.c.l.b16 %v474
    %v1581 = vunpack.c.l.b16 %v475
    %v1582 = vunpack.c.h.b16 %v475
    %v1583 = vunpack.c.l.b16 %v476
    %v1584 = vunpack.c.h.b16 %v476
    %v1585 = vunpack.c.l.b16 %v477
    %v1586 = vunpack.c.l.b16 %v478
    %v1587 = vunpack.c.h.b16 %v478
    %v1588 = vunpack.c.l.b16 %v479
    %v1589 = vunpack.c.h.b16 %v479
    %v1590 = vunpack.c.l.b16 %v480
    %v1591 = vunpack.c.l.b16 %v481
    %v1592 = vunpack.c.h.b16 %v481
    %v1593 = vunpack.c.l.b16 %v482
    %v1594 = vunpack.c.h.b16 %v482
    %v1595 = vunpack.c.l.b16 %v483
    %v1596 = vunpack.c.l.b16 %v484
    %v1597 = vunpack.c.h.b16 %v484
    %v1598 = vunpack.c.l.b16 %v485
    %v1599 = vunpack.c.h.b16 %v485
    %v1600 = vunpack.c.l.b16 %v486
    %v1601 = vunpack.c.l.b16 %v487
    %v1602 = vunpack.c.h.b16 %v487
    %v1603 = vunpack.c.l.b16 %v488
    %v1604 = vunpack.c.h.b16 %v488
    %v1605 = vunpack.c.l.b16 %v489
    %v1606 = vunpack.c.l.b16 %v490
    %v1607 = vunpack.c.h.b16 %v490
    %v1608 = vunpack.c.l.b16 %v491
    %v1609 = vunpack.c.h.b16 %v491
    %v1610 = vunpack.c.l.b16 %v492
    %v1611 = vunpack.c.l.b16 %v493
    %v1612 = vunpack.c.h.b16 %v493
    %v1613 = vunpack.c.l.b16 %v494
    %v1614 = vunpack.c.h.b16 %v494
    %v1615 = vunpack.c.l.b16 %v495
    %v1616 = vunpack.c.l.b16 %v496
    %v1617 = vunpack.c.h.b16 %v496
    %v1618 = vunpack.c.l.b16 %v497
    %v1619 = vunpack.c.h.b16 %v497
    %v1620 = vunpack.c.l.b16 %v498
    %v1621 = vunpack.c.l.b16 %v499
    %v1622 = vunpack.c.h.b16 %v499
    %v1623 = vunpack.c.l.b16 %v500
    %v1624 = vunpack.c.h.b16 %v500
    %v1625 = vunpack.c.l.b16 %v501
    %v1626 = vunpack.c.l.b16 %v502
    %v1627 = vunpack.c.h.b16 %v502
    %v1628 = vunpack.c.l.b16 %v503
    %v1629 = vunpack.c.h.b16 %v503
    %v1630 = vunpack.c.l.b16 %v504
    %v1631 = vunpack.c.l.b16 %v505
    %v1632 = vunpack.c.h.b16 %v505
    %v1633 = vunpack.c.l.b16 %v506
    %v1634 = vunpack.c.h.b16 %v506
    %v1635 = vunpack.c.l.b16 %v507
    %v1636 = vunpack.c.l.b16 %v508
    %v1637 = vunpack.c.h.b16 %v508
    %v1638 = vunpack.c.l.b16 %v509
    %v1639 = vunpack.c.h.b16 %v509
    %v1640 = vunpack.c.l.b16 %v510
    %v1641 = vunpack.c.l.b16 %v511
    %v1642 = vunpack.c.h.b16 %v511
    %v1643 = vunpack.c.l.b16 %v512
    %v1644 = vunpack.c.h.b16 %v512
    %v1645 = vunpack.c.l.b16 %v513
    %v1646 = vunpack.c.l.b16 %v514
    %v1647 = vunpack.c.h.b16 %v514
    %v1648 = vunpack.c.l.b16 %v515
    %v1649 = vunpack.c.h.b16 %v515
    %v1650 = vunpack.c.l.b16 %v516
    %v1651 = vunpack.c.l.b16 %v517
    %v1652 = vunpack.c.h.b16 %v517
    %v1653 = vunpack.c.l.b16 %v518
    %v1654 = vunpack.c.h.b16 %v518
    %v1655 = vunpack.c.l.b16 %v519
    %v1656 = vunpack.c.l.b16 %v520
    %v1657 = vunpack.c.h.b16 %v520
    %v1658 = vunpack.c.l.b16 %v521
    %v1659 = vunpack.c.h.b16 %v521
    %v1660 = vunpack.c.l.b16 %v522
    %v1661 = vunpack.c.l.b16 %v523
    %v1662 = vunpack.c.h.b16 %v523
    %v1663 = vunpack.c.l.b16 %v524
    %v1664 = vunpack.c.h.b16 %v524
    %v1665 = vunpack.c.l.b16 %v525
    %v1666 = vunpack.c.l.b16 %v526
    %v1667 = vunpack.c.h.b16 %v526
    %v1668 = vunpack.c.l.b16 %v527
    %v1669 = vunpack.c.h.b16 %v527
    %v1670 = vunpack.c.l.b16 %v528
    %v1671 = vunpack.c.l.b16 %v529
    %v1672 = vunpack.c.h.b16 %v529
    %v1673 = vunpack.c.l.b16 %v530
    %v1674 = vunpack.c.h.b16 %v530
    %v1675 = vunpack.c.l.b16 %v531
    %v1676 = vunpack.c.l.b16 %v532
    %v1677 = vunpack.c.h.b16 %v532
    %v1678 = vunpack.c.l.b16 %v533
    %v1679 = vunpack.c.h.b16 %v533
    %v1680 = vunpack.c.l.b16 %v534
    %v1681 = vunpack.c.l.b16 %v535
    %v1682 = vunpack.c.h.b16 %v535
    %v1683 = vunpack.c.l.b16 %v536
    %v1684 = vunpack.c.h.b16 %v536
    %v1685 = vunpack.c.l.b16 %v537
    %v1686 = vpack.c.b16 %v981, %v976
    %v1687 = vpack.c.b16 %v982, %v977
    %v1688 = vpack.c.b16 %v983, %v978
    %v1689 = vpack.c.b16 %v984, %v979
    %v1690 = vpack.c.b16 %v985, %v980
    %v1691 = vpack.c.b16 %v991, %v986
    %v1692 = vpack.c.b16 %v992, %v987
    %v1693 = vpack.c.b16 %v993, %v988
    %v1694 = vpack.c.b16 %v994, %v989
    %v1695 = vpack.c.b16 %v995, %v990
    %v1696 = vpack.c.b16 %v1001, %v996
    %v1697 = vpack.c.b16 %v1002, %v997
    %v1698 = vpack.c.b16 %v1003, %v998
    %v1699 = vpack.c.b16 %v1004, %v999
    %v1700 = vpack.c.b16 %v1005, %v1000
    %v1701 = vpack.c.b16 %v1011, %v1006
    %v1702 = vpack.c.b16 %v1012, %v1007
    %v1703 = vpack.c.b16 %v1013, %v1008
    %v1704 = vpack.c.b16 %v1014, %v1009
    %v1705 = vpack.c.b16 %v1015, %v1010
    %v1706 = vpack.c.b16 %v1021, %v1016
    %v1707 = vpack.c.b16 %v1022, %v1017
    %v1708 = vpack.c.b16 %v1023, %v1018
    %v1709 = vpack.c.b16 %v1024, %v1019
    %v1710 = vpack.c.b16 %v1025, %v1020
    %v1711 = vpack.c.b16 %v1031, %v1026
    %v1712 = vpack.c.b16 %v1032, %v1027
    %v1713 = vpack.c.b16 %v1033, %v1028
    %v1714 = vpack.c.b16 %v1034, %v1029
    %v1715 = vpack.c.b16 %v1035, %v1030
    %v1716 = vpack.c.b16 %v1041, %v1036
    %v1717 = vpack.c.b16 %v1042, %v1037
    %v1718 = vpack.c.b16 %v1043, %v1038
    %v1719 = vpack.c.b16 %v1044, %v1039
    %v1720 = vpack.c.b16 %v1045, %v1040
    %v1721 = vpack.c.b16 %v1051, %v1046
    %v1722 = vpack.c.b16 %v1052, %v1047
    %v1723 = vpack.c.b16 %v1053, %v1048
    %v1724 = vpack.c.b16 %v1054, %v1049
    %v1725 = vpack.c.b16 %v1055, %v1050
    %v1726 = vpack.c.b16 %v1061, %v1056
    %v1727 = vpack.c.b16 %v1062, %v1057
    %v1728 = vpack.c.b16 %v1063, %v1058
    %v1729 = vpack.c.b16 %v1064, %v1059
    %v1730 = vpack.c.b16 %v1065, %v1060
    %v1731 = vpack.c.b16 %v1071, %v1066
    %v1732 = vpack.c.b16 %v1072, %v1067
    %v1733 = vpack.c.b16 %v1073, %v1068
    %v1734 = vpack.c.b16 %v1074, %v1069
    %v1735 = vpack.c.b16 %v1075, %v1070
    %v1736 = vpack.c.b16 %v1081, %v1076
    %v1737 = vpack.c.b16 %v1082, %v1077
    %v1738 = vpack.c.b16 %v1083, %v1078
    %v1739 = vpack.c.b16 %v1084, %v1079
    %v1740 = vpack.c.b16 %v1085, %v1080
    %v1741 = vpack.c.b16 %v1091, %v1086
    %v1742 = vpack.c.b16 %v1092, %v1087
    %v1743 = vpack.c.b16 %v1093, %v1088
    %v1744 = vpack.c.b16 %v1094, %v1089
    %v1745 = vpack.c.b16 %v1095, %v1090
    %v1746 = vpack.c.b16 %v1101, %v1096
    %v1747 = vpack.c.b16 %v1102, %v1097
    %v1748 = vpack.c.b16 %v1103, %v1098
    %v1749 = vpack.c.b16 %v1104, %v1099
    %v1750 = vpack.c.b16 %v1105, %v1100
    %v1751 = vpack.c.b16 %v1111, %v1106
    %v1752 = vpack.c.b16 %v1112, %v1107
    %v1753 = vpack.c.b16 %v1113, %v1108
    %v1754 = vpack.c.b16 %v1114, %v1109
    %v1755 = vpack.c.b16 %v1115, %v1110
    %v1756 = vpack.c.b16 %v1121, %v1116
    %v1757 = vpack.c.b16 %v1122, %v1117
    %v1758 = vpack.c.b16 %v1123, %v1118
    %v1759 = vpack.c.b16 %v1124, %v1119
    %v1760 = vpack.c.b16 %v1125, %v1120
    %v1761 = vpack.c.b16 %v1131, %v1126
    %v1762 = vpack.c.b16 %v1132, %v1127
    %v1763 = vpack.c.b16 %v1133, %v1128
    %v1764 = vpack.c.b16 %v1134, %v1129
    %v1765 = vpack.c.b16 %v1135, %v1130
    %v1766 = vpack.c.b16 %v1141, %v1136
    %v1767 = vpack.c.b16 %v1142, %v1137
    %v1768 = vpack.c.b16 %v1143, %v1138
    %v1769 = vpack.c.b16 %v1144, %v1139
    %v1770 = vpack.c.b16 %v1145, %v1140
    %v1771 = vpack.c.b16 %v1151, %v1146
    %v1772 = vpack.c.b16 %v1152, %v1147
    %v1773 = vpack.c.b16 %v1153, %v1148
    %v1774 = vpack.c.b16 %v1154, %v1149
    %v1775 = vpack.c.b16 %v1155, %v1150
    %v1776 = vpack.c.b16 %v1161, %v1156
    %v1777 = vpack.c.b16 %v1162, %v1157
    %v1778 = vpack.c.b16 %v1163, %v1158
    %v1779 = vpack.c.b16 %v1164, %v1159
    %v1780 = vpack.c.b16 %v1165, %v1160
    %v1781 = vpack.c.b16 %v1171, %v1166
    %v1782 = vpack.c.b16 %v1172, %v1167
    %v1783 = vpack.c.b16 %v1173, %v1168
    %v1784 = vpack.c.b16 %v1174, %v1169
    %v1785 = vpack.c.b16 %v1175, %v1170
    %v1786 = vpack.c.b16 %v1181, %v1176
    %v1787 = vpack.c.b16 %v1182, %v1177
    %v1788 = vpack.c.b16 %v1183, %v1178
    %v1789 = vpack.c.b16 %v1184, %v1179
    %v1790 = vpack.c.b16 %v1185, %v1180
    %v1791 = vpack.c.b16 %v1191, %v1186
    %v1792 = vpack.c.b16 %v1192, %v1187
    %v1793 = vpack.c.b16 %v1193, %v1188
    %v1794 = vpack.c.b16 %v1194, %v1189
    %v1795 = vpack.c.b16 %v1195, %v1190
    %v1796 = vpack.c.b16 %v1201, %v1196
    %v1797 = vpack.c.b16 %v1202, %v1197
    %v1798 = vpack.c.b16 %v1203, %v1198
    %v1799 = vpack.c.b16 %v1204, %v1199
    %v1800 = vpack.c.b16 %v1205, %v1200
    %v1801 = vpack.c.b16 %v1211, %v1206
    %v1802 = vpack.c.b16 %v1212, %v1207
    %v1803 = vpack.c.b16 %v1213, %v1208
    %v1804 = vpack.c.b16 %v1214, %v1209
    %v1805 = vpack.c.b16 %v1215, %v1210
    %v1806 = vpack.c.b16 %v1221, %v1216
    %v1807 = vpack.c.b16 %v1222, %v1217
    %v1808 = vpack.c.b16 %v1223, %v1218
    %v1809 = vpack.c.b16 %v1224, %v1219
    %v1810 = vpack.c.b16 %v1225, %v1220
    %v1811 = vpack.c.b16 %v1231, %v1226
    %v1812 = vpack.c.b16 %v1232, %v1227
    %v1813 = vpack.c.b16 %v1233, %v1228
    %v1814 = vpack.c.b16 %v1234, %v1229
    %v1815 = vpack.c.b16 %v1235, %v1230
    %v1816 = vpack.c.b16 %v1241, %v1236
    %v1817 = vpack.c.b16 %v1242, %v1237
    %v1818 = vpack.c.b16 %v1243, %v1238
    %v1819 = vpack.c.b16 %v1244, %v1239
    %v1820 = vpack.c.b16 %v1245, %v1240
    %v1821 = vpack.c.b16 %v1251, %v1246
    %v1822 = vpack.c.b16 %v1252, %v1247
    %v1823 = vpack.c.b16 %v1253, %v1248
    %v1824 = vpack.c.b16 %v1254, %v1249
    %v1825 = vpack.c.b16 %v1255, %v1250
    %v1826 = vpack.c.b16 %v1261, %v1256
    %v1827 = vpack.c.b16 %v1262, %v1257
    %v1828 = vpack.c.b16 %v1263, %v1258
    %v1829 = vpack.c.b16 %v1264, %v1259
    %v1830 = vpack.c.b16 %v1265, %v1260
    %v1831 = vpack.c.b16 %v1271, %v1266
    %v1832 = vpack.c.b16 %v1272, %v1267
    %v1833 = vpack.c.b16 %v1273, %v1268
    %v1834 = vpack.c.b16 %v1274, %v1269
    %v1835 = vpack.c.b16 %v1275, %v1270
    %v1836 = vpack.c.b16 %v1281, %v1276
    %v1837 = vpack.c.b16 %v1282, %v1277
    %v1838 = vpack.c.b16 %v1283, %v1278
    %v1839 = vpack.c.b16 %v1284, %v1279
    %v1840 = vpack.c.b16 %v1285, %v1280
    %v1841 = vpack.c.b16 %v1291, %v1286
    %v1842 = vpack.c.b16 %v1292, %v1287
    %v1843 = vpack.c.b16 %v1293, %v1288
    %v1844 = vpack.c.b16 %v1294, %v1289
    %v1845 = vpack.c.b16 %v1295, %v1290
    %v1846 = vpack.c.b16 %v1301, %v1296
    %v1847 = vpack.c.b16 %v1302, %v1297
    %v1848 = vpack.c.b16 %v1303, %v1298
    %v1849 = vpack.c.b16 %v1304, %v1299
    %v1850 = vpack.c.b16 %v1305, %v1300
    %v1851 = vpack.c.b16 %v1311, %v1306
    %v1852 = vpack.c.b16 %v1312, %v1307
    %v1853 = vpack.c.b16 %v1313, %v1308
    %v1854 = vpack.c.b16 %v1314, %v1309
    %v1855 = vpack.c.b16 %v1315, %v1310
    %v1856 = vpack.c.b16 %v1321, %v1316
    %v1857 = vpack.c.b16 %v1322, %v1317
    %v1858 = vpack.c.b16 %v1323, %v1318
    %v1859 = vpack.c.b16 %v1324, %v1319
    %v1860 = vpack.c.b16 %v1325, %v1320
    %v1861 = vpack.c.b16 %v1331, %v1326
    %v1862 = vpack.c.b16 %v1332, %v1327
    %v1863 = vpack.c.b16 %v1333, %v1328
    %v1864 = vpack.c.b16 %v1334, %v1329
    %v1865 = vpack.c.b16 %v1335, %v1330
    %v1866 = vpack.c.b16 %v1341, %v1336
    %v1867 = vpack.c.b16 %v1342, %v1337
    %v1868 = vpack.c.b16 %v1343, %v1338
    %v1869 = vpack.c.b16 %v1344, %v1339
    %v1870 = vpack.c.b16 %v1345, %v1340
    %v1871 = vpack.c.b16 %v1351, %v1346
    %v1872 = vpack.c.b16 %v1352, %v1347
    %v1873 = vpack.c.b16 %v1353, %v1348
    %v1874 = vpack.c.b16 %v1354, %v1349
    %v1875 = vpack.c.b16 %v1355, %v1350
    %v1876 = vpack.c.b16 %v1361, %v1356
    %v1877 = vpack.c.b16 %v1362, %v1357
    %v1878 = vpack.c.b16 %v1363, %v1358
    %v1879 = vpack.c.b16 %v1364, %v1359
    %v1880 = vpack.c.b16 %v1365, %v1360
    %v1881 = vpack.c.b16 %v1371, %v1366
    %v1882 = vpack.c.b16 %v1372, %v1367
    %v1883 = vpack.c.b16 %v1373, %v1368
    %v1884 = vpack.c.b16 %v1374, %v1369
    %v1885 = vpack.c.b16 %v1375, %v1370
    %v1886 = vpack.c.b16 %v1381, %v1376
    %v1887 = vpack.c.b16 %v1382, %v1377
    %v1888 = vpack.c.b16 %v1383, %v1378
    %v1889 = vpack.c.b16 %v1384, %v1379
    %v1890 = vpack.c.b16 %v1385, %v1380
    %v1891 = vpack.c.b16 %v1391, %v1386
    %v1892 = vpack.c.b16 %v1392, %v1387
    %v1893 = vpack.c.b16 %v1393, %v1388
    %v1894 = vpack.c.b16 %v1394, %v1389
    %v1895 = vpack.c.b16 %v1395, %v1390
    %v1896 = vpack.c.b16 %v1401, %v1396
    %v1897 = vpack.c.b16 %v1402, %v1397
    %v1898 = vpack.c.b16 %v1403, %v1398
    %v1899 = vpack.c.b16 %v1404, %v1399
    %v1900 = vpack.c.b16 %v1405, %v1400
    %v1901 = vpack.c.b16 %v1411, %v1406
    %v1902 = vpack.c.b16 %v1412, %v1407
    %v1903 = vpack.c.b16 %v1413, %v1408
    %v1904 = vpack.c.b16 %v1414, %v1409
    %v1905 = vpack.c.b16 %v1415, %v1410
    %v1906 = vpack.c.b16 %v1421, %v1416
    %v1907 = vpack.c.b16 %v1422, %v1417
    %v1908 = vpack.c.b16 %v1423, %v1418
    %v1909 = vpack.c.b16 %v1424, %v1419
    %v1910 = vpack.c.b16 %v1425, %v1420
    %v1911 = vpack.c.b16 %v1431, %v1426
    %v1912 = vpack.c.b16 %v1432, %v1427
    %v1913 = vpack.c.b16 %v1433, %v1428
    %v1914 = vpack.c.b16 %v1434, %v1429
    %v1915 = vpack.c.b16 %v1435, %v1430
    %v1916 = vpack.c.b16 %v1441, %v1436
    %v1917 = vpack.c.b16 %v1442, %v1437
    %v1918 = vpack.c.b16 %v1443, %v1438
    %v1919 = vpack.c.b16 %v1444, %v1439
    %v1920 = vpack.c.b16 %v1445, %v1440
    %v1921 = vpack.c.b16 %v1451, %v1446
    %v1922 = vpack.c.b16 %v1452, %v1447
    %v1923 = vpack.c.b16 %v1453, %v1448
    %v1924 = vpack.c.b16 %v1454, %v1449
    %v1925 = vpack.c.b16 %v1455, %v1450
    %v1926 = vpack.c.b16 %v1461, %v1456
    %v1927 = vpack.c.b16 %v1462, %v1457
    %v1928 = vpack.c.b16 %v1463, %v1458
    %v1929 = vpack.c.b16 %v1464, %v1459
    %v1930 = vpack.c.b16 %v1465, %v1460
    %v1931 = vpack.c.b16 %v1471, %v1466
    %v1932 = vpack.c.b16 %v1472, %v1467
    %v1933 = vpack.c.b16 %v1473, %v1468
    %v1934 = vpack.c.b16 %v1474, %v1469
    %v1935 = vpack.c.b16 %v1475, %v1470
    %v1936 = vpack.c.b16 %v1481, %v1476
    %v1937 = vpack.c.b16 %v1482, %v1477
    %v1938 = vpack.c.b16 %v1483, %v1478
    %v1939 = vpack.c.b16 %v1484, %v1479
    %v1940 = vpack.c.b16 %v1485, %v1480
    %v1941 = vpack.c.b16 %v1491, %v1486
    %v1942 = vpack.c.b16 %v1492, %v1487
    %v1943 = vpack.c.b16 %v1493, %v1488
    %v1944 = vpack.c.b16 %v1494, %v1489
    %v1945 = vpack.c.b16 %v1495, %v1490
    %v1946 = vpack.c.b16 %v1501, %v1496
    %v1947 = vpack.c.b16 %v1502, %v1497
    %v1948 = vpack.c.b16 %v1503, %v1498
    %v1949 = vpack.c.b16 %v1504, %v1499
    %v1950 = vpack.c.b16 %v1505, %v1500
    %v1951 = vpack.c.b16 %v1511, %v1506
    %v1952 = vpack.c.b16 %v1512, %v1507
    %v1953 = vpack.c.b16 %v1513, %v1508
    %v1954 = vpack.c.b16 %v1514, %v1509
    %v1955 = vpack.c.b16 %v1515, %v1510
    %v1956 = vpack.c.b16 %v1521, %v1516
    %v1957 = vpack.c.b16 %v1522, %v1517
    %v1958 = vpack.c.b16 %v1523, %v1518
    %v1959 = vpack.c.b16 %v1524, %v1519
    %v1960 = vpack.c.b16 %v1525, %v1520
    %v1961 = vpack.c.b16 %v1531, %v1526
    %v1962 = vpack.c.b16 %v1532, %v1527
    %v1963 = vpack.c.b16 %v1533, %v1528
    %v1964 = vpack.c.b16 %v1534, %v1529
    %v1965 = vpack.c.b16 %v1535, %v1530
    %v1966 = vpack.c.b16 %v1541, %v1536
    %v1967 = vpack.c.b16 %v1542, %v1537
    %v1968 = vpack.c.b16 %v1543, %v1538
    %v1969 = vpack.c.b16 %v1544, %v1539
    %v1970 = vpack.c.b16 %v1545, %v1540
    %v1971 = vpack.c.b16 %v1551, %v1546
    %v1972 = vpack.c.b16 %v1552, %v1547
    %v1973 = vpack.c.b16 %v1553, %v1548
    %v1974 = vpack.c.b16 %v1554, %v1549
    %v1975 = vpack.c.b16 %v1555, %v1550
    %v1976 = vpack.c.b16 %v1561, %v1556
    %v1977 = vpack.c.b16 %v1562, %v1557
    %v1978 = vpack.c.b16 %v1563, %v1558
    %v1979 = vpack.c.b16 %v1564, %v1559
    %v1980 = vpack.c.b16 %v1565, %v1560
    %v1981 = vpack.c.b16 %v1571, %v1566
    %v1982 = vpack.c.b16 %v1572, %v1567
    %v1983 = vpack.c.b16 %v1573, %v1568
    %v1984 = vpack.c.b16 %v1574, %v1569
    %v1985 = vpack.c.b16 %v1575, %v1570
    %v1986 = vpack.c.b16 %v1581, %v1576
    %v1987 = vpack.c.b16 %v1582, %v1577
    %v1988 = vpack.c.b16 %v1583, %v1578
    %v1989 = vpack.c.b16 %v1584, %v1579
    %v1990 = vpack.c.b16 %v1585, %v1580
    %v1991 = vpack.c.b16 %v1591, %v1586
    %v1992 = vpack.c.b16 %v1592, %v1587
    %v1993 = vpack.c.b16 %v1593, %v1588
    %v1994 = vpack.c.b16 %v1594, %v1589
    %v1995 = vpack.c.b16 %v1595, %v1590
    %v1996 = vpack.c.b16 %v1601, %v1596
    %v1997 = vpack.c.b16 %v1602, %v1597
    %v1998 = vpack.c.b16 %v1603, %v1598
    %v1999 = vpack.c.b16 %v1604, %v1599
    %v2000 = vpack.c.b16 %v1605, %v1600
    %v2001 = vpack.c.b16 %v1611, %v1606
    %v2002 = vpack.c.b16 %v1612, %v1607
    %v2003 = vpack.c.b16 %v1613, %v1608
    %v2004 = vpack.c.b16 %v1614, %v1609
    %v2005 = vpack.c.b16 %v1615, %v1610
    %v2006 = vpack.c.b16 %v1621, %v1616
    %v2007 = vpack.c.b16 %v1622, %v1617
    %v2008 = vpack.c.b16 %v1623, %v1618
    %v2009 = vpack.c.b16 %v1624, %v1619
    %v2010 = vpack.c.b16 %v1625, %v1620
    %v2011 = vpack.c.b16 %v1631, %v1626
    %v2012 = vpack.c.b16 %v1632, %v1627
    %v2013 = vpack.c.b16 %v1633, %v1628
    %v2014 = vpack.c.b16 %v1634, %v1629
    %v2015 = vpack.c.b16 %v1635, %v1630
    %v2016 = vpack.c.b16 %v1641, %v1636
    %v2017 = vpack.c.b16 %v1642, %v1637
    %v2018 = vpack.c.b16 %v1643, %v1638
    %v2019 = vpack.c.b16 %v1644, %v1639
    %v2020 = vpack.c.b16 %v1645, %v1640
    %v2021 = vpack.c.b16 %v1651, %v1646
    %v2022 = vpack.c.b16 %v1652, %v1647
    %v2023 = vpack.c.b16 %v1653, %v1648
    %v2024 = vpack.c.b16 %v1654, %v1649
    %v2025 = vpack.c.b16 %v1655, %v1650
    %v2026 = vpack.c.b16 %v1661, %v1656
    %v2027 = vpack.c.b16 %v1662, %v1657
    %v2028 = vpack.c.b16 %v1663, %v1658
    %v2029 = vpack.c.b16 %v1664, %v1659
    %v2030 = vpack.c.b16 %v1665, %v1660
    %v2031 = vpack.c.b16 %v1671, %v1666
    %v2032 = vpack.c.b16 %v1672, %v1667
    %v2033 = vpack.c.b16 %v1673, %v1668
    %v2034 = vpack.c.b16 %v1674, %v1669
    %v2035 = vpack.c.b16 %v1675, %v1670
    %v2036 = vpack.c.b16 %v1681, %v1676
    %v2037 = vpack.c.b16 %v1682, %v1677
    %v2038 = vpack.c.b16 %v1683, %v1678
    %v2039 = vpack.c.b16 %v1684, %v1679
    %v2040 = vpack.c.b16 %v1685, %v1680
    %vm2391 = vcmask 900096
    %v2393 = vsel %vm2391, %v111, 0
    %vm2395 = vcmask 1046528
    %v2397 = vsel %vm2395, %v2036, 0
    %v2400 = vsel %vm2395, %v2037, 0
    %v2403 = vsel %vm2395, %v2038, 0
    %v2406 = vsel %vm2395, %v2039, 0
    %v2409 = vsel %vm2395, %v2040, 0
    %2411 = vmatpush.bf16.msra.mxu0 %v1721
    %2412 = vmatpush.bf16.msra.mxu0 %v1716
    %2413 = vmatpush.bf16.msra.mxu0 %v1711
    %2414 = vmatpush.bf16.msra.mxu0 %v1706
    %2415 = vmatpush.bf16.msra.mxu0 %v1701
    %2416 = vmatpush.bf16.msra.mxu0 %v1696
    %2417 = vmatpush.bf16.msra.mxu0 %v1691
    %2418 = vmatpush.bf16.msra.mxu0 %v1686
    %2419 = vmatmul.bf16.gmra.mxu0 %v103
    %v2420 = vpop.f32.mrf.mxu0
    %v2421 = vadd.f32 %v540, %v2420
    %v2422 = vpop.f32.mrf.mxu0
    %2423 = vdwg.mxu0
    %2424 = vmatpush.bf16.msra.mxu0 %v1761
    %2425 = vmatpush.bf16.msra.mxu0 %v1756
    %2426 = vmatpush.bf16.msra.mxu0 %v1751
    %2427 = vmatpush.bf16.msra.mxu0 %v1746
    %2428 = vmatpush.bf16.msra.mxu0 %v1741
    %2429 = vmatpush.bf16.msra.mxu0 %v1736
    %2430 = vmatpush.bf16.msra.mxu0 %v1731
    %2431 = vmatpush.bf16.msra.mxu0 %v1726
    %2432 = vmatmul.bf16.gmra.mxu0 %v104
    %v2433 = vpop.f32.mrf.mxu0
    %v2434 = vadd.f32 %v2421, %v2433
    %v2435 = vpop.f32.mrf.mxu0
    %2436 = vdwg.mxu0
    %2437 = vmatpush.bf16.msra.mxu0 %v1801
    %2438 = vmatpush.bf16.msra.mxu0 %v1796
    %2439 = vmatpush.bf16.msra.mxu0 %v1791
    %2440 = vmatpush.bf16.msra.mxu0 %v1786
    %2441 = vmatpush.bf16.msra.mxu0 %v1781
    %2442 = vmatpush.bf16.msra.mxu0 %v1776
    %2443 = vmatpush.bf16.msra.mxu0 %v1771
    %2444 = vmatpush.bf16.msra.mxu0 %v1766
    %2445 = vmatmul.bf16.gmra.mxu0 %v105
    %v2446 = vpop.f32.mrf.mxu0
    %v2447 = vadd.f32 %v2434, %v2446
    %v2448 = vpop.f32.mrf.mxu0
    %2449 = vdwg.mxu0
    %2450 = vmatpush.bf16.msra.mxu0 %v1841
    %2451 = vmatpush.bf16.msra.mxu0 %v1836
    %2452 = vmatpush.bf16.msra.mxu0 %v1831
    %2453 = vmatpush.bf16.msra.mxu0 %v1826
    %2454 = vmatpush.bf16.msra.mxu0 %v1821
    %2455 = vmatpush.bf16.msra.mxu0 %v1816
    %2456 = vmatpush.bf16.msra.mxu0 %v1811
    %2457 = vmatpush.bf16.msra.mxu0 %v1806
    %2458 = vmatmul.bf16.gmra.mxu0 %v106
    %v2459 = vpop.f32.mrf.mxu0
    %v2460 = vadd.f32 %v2447, %v2459
    %v2461 = vpop.f32.mrf.mxu0
    %2462 = vdwg.mxu0
    %2463 = vmatpush.bf16.msra.mxu0 %v1881
    %2464 = vmatpush.bf16.msra.mxu0 %v1876
    %2465 = vmatpush.bf16.msra.mxu0 %v1871
    %2466 = vmatpush.bf16.msra.mxu0 %v1866
    %2467 = vmatpush.bf16.msra.mxu0 %v1861
    %2468 = vmatpush.bf16.msra.mxu0 %v1856
    %2469 = vmatpush.bf16.msra.mxu0 %v1851
    %2470 = vmatpush.bf16.msra.mxu0 %v1846
    %2471 = vmatmul.bf16.gmra.mxu0 %v107
    %v2472 = vpop.f32.mrf.mxu0
    %v2473 = vadd.f32 %v2460, %v2472
    %v2474 = vpop.f32.mrf.mxu0
    %2475 = vdwg.mxu0
    %2476 = vmatpush.bf16.msra.mxu0 %v1921
    %2477 = vmatpush.bf16.msra.mxu0 %v1916
    %2478 = vmatpush.bf16.msra.mxu0 %v1911
    %2479 = vmatpush.bf16.msra.mxu0 %v1906
    %2480 = vmatpush.bf16.msra.mxu0 %v1901
    %2481 = vmatpush.bf16.msra.mxu0 %v1896
    %2482 = vmatpush.bf16.msra.mxu0 %v1891
    %2483 = vmatpush.bf16.msra.mxu0 %v1886
    %2484 = vmatmul.bf16.gmra.mxu0 %v108
    %v2485 = vpop.f32.mrf.mxu0
    %v2486 = vadd.f32 %v2473, %v2485
    %v2487 = vpop.f32.mrf.mxu0
    %2488 = vdwg.mxu0
    %2489 = vmatpush.bf16.msra.mxu0 %v1961
    %2490 = vmatpush.bf16.msra.mxu0 %v1956
    %2491 = vmatpush.bf16.msra.mxu0 %v1951
    %2492 = vmatpush.bf16.msra.mxu0 %v1946
    %2493 = vmatpush.bf16.msra.mxu0 %v1941
    %2494 = vmatpush.bf16.msra.mxu0 %v1936
    %2495 = vmatpush.bf16.msra.mxu0 %v1931
    %2496 = vmatpush.bf16.msra.mxu0 %v1926
    %2497 = vmatmul.bf16.gmra.mxu0 %v109
    %v2498 = vpop.f32.mrf.mxu0
    %v2499 = vadd.f32 %v2486, %v2498
    %v2500 = vpop.f32.mrf.mxu0
    %2501 = vdwg.mxu0
    %2502 = vmatpush.bf16.msra.mxu0 %v2001
    %2503 = vmatpush.bf16.msra.mxu0 %v1996
    %2504 = vmatpush.bf16.msra.mxu0 %v1991
    %2505 = vmatpush.bf16.msra.mxu0 %v1986
    %2506 = vmatpush.bf16.msra.mxu0 %v1981
    %2507 = vmatpush.bf16.msra.mxu0 %v1976
    %2508 = vmatpush.bf16.msra.mxu0 %v1971
    %2509 = vmatpush.bf16.msra.mxu0 %v1966
    %2510 = vmatmul.bf16.gmra.mxu0 %v110
    %v2511 = vpop.f32.mrf.mxu0
    %v2512 = vadd.f32 %v2499, %v2511
    %v2513 = vpop.f32.mrf.mxu0
    %2514 = vdwg.mxu0
    %2515 = vmatpush.bf16.msra.mxu0 0
    %2516 = vmatpush.bf16.msra.mxu0 %v2397
    %2517 = vmatpush.bf16.msra.mxu0 %v2031
    %2518 = vmatpush.bf16.msra.mxu0 %v2026
    %2519 = vmatpush.bf16.msra.mxu0 %v2021
    %2520 = vmatpush.bf16.msra.mxu0 %v2016
    %2521 = vmatpush.bf16.msra.mxu0 %v2011
    %2522 = vmatpush.bf16.msra.mxu0 %v2006
    %2523 = vmatmul.bf16.gmra.mxu0 %v2393
    %v2524 = vpop.f32.mrf.mxu0
    %v2525 = vadd.f32 %v2512, %v2524
    %v2526 = vpop.f32.mrf.mxu0
    %2527 = vdwg.mxu0
    %2528 = vmatpush.bf16.msra.mxu0 %v1722
    %2529 = vmatpush.bf16.msra.mxu0 %v1717
    %2530 = vmatpush.bf16.msra.mxu0 %v1712
    %2531 = vmatpush.bf16.msra.mxu0 %v1707
    %2532 = vmatpush.bf16.msra.mxu0 %v1702
    %2533 = vmatpush.bf16.msra.mxu0 %v1697
    %2534 = vmatpush.bf16.msra.mxu0 %v1692
    %2535 = vmatpush.bf16.msra.mxu0 %v1687
    %2536 = vmatmul.bf16.gmra.mxu0 %v103
    %v2537 = vpop.f32.mrf.mxu0
    %v2538 = vadd.f32 %v541, %v2537
    %v2539 = vpop.f32.mrf.mxu0
    %2540 = vdwg.mxu0
    %2541 = vmatpush.bf16.msra.mxu0 %v1762
    %2542 = vmatpush.bf16.msra.mxu0 %v1757
    %2543 = vmatpush.bf16.msra.mxu0 %v1752
    %2544 = vmatpush.bf16.msra.mxu0 %v1747
    %2545 = vmatpush.bf16.msra.mxu0 %v1742
    %2546 = vmatpush.bf16.msra.mxu0 %v1737
    %2547 = vmatpush.bf16.msra.mxu0 %v1732
    %2548 = vmatpush.bf16.msra.mxu0 %v1727
    %2549 = vmatmul.bf16.gmra.mxu0 %v104
    %v2550 = vpop.f32.mrf.mxu0
    %v2551 = vadd.f32 %v2538, %v2550
    %v2552 = vpop.f32.mrf.mxu0
    %2553 = vdwg.mxu0
    %2554 = vmatpush.bf16.msra.mxu0 %v1802
    %2555 = vmatpush.bf16.msra.mxu0 %v1797
    %2556 = vmatpush.bf16.msra.mxu0 %v1792
    %2557 = vmatpush.bf16.msra.mxu0 %v1787
    %2558 = vmatpush.bf16.msra.mxu0 %v1782
    %2559 = vmatpush.bf16.msra.mxu0 %v1777
    %2560 = vmatpush.bf16.msra.mxu0 %v1772
    %2561 = vmatpush.bf16.msra.mxu0 %v1767
    %2562 = vmatmul.bf16.gmra.mxu0 %v105
    %v2563 = vpop.f32.mrf.mxu0
    %v2564 = vadd.f32 %v2551, %v2563
    %v2565 = vpop.f32.mrf.mxu0
    %2566 = vdwg.mxu0
    %2567 = vmatpush.bf16.msra.mxu0 %v1842
    %2568 = vmatpush.bf16.msra.mxu0 %v1837
    %2569 = vmatpush.bf16.msra.mxu0 %v1832
    %2570 = vmatpush.bf16.msra.mxu0 %v1827
    %2571 = vmatpush.bf16.msra.mxu0 %v1822
    %2572 = vmatpush.bf16.msra.mxu0 %v1817
    %2573 = vmatpush.bf16.msra.mxu0 %v1812
    %2574 = vmatpush.bf16.msra.mxu0 %v1807
    %2575 = vmatmul.bf16.gmra.mxu0 %v106
    %v2576 = vpop.f32.mrf.mxu0
    %v2577 = vadd.f32 %v2564, %v2576
    %v2578 = vpop.f32.mrf.mxu0
    %2579 = vdwg.mxu0
    %2580 = vmatpush.bf16.msra.mxu0 %v1882
    %2581 = vmatpush.bf16.msra.mxu0 %v1877
    %2582 = vmatpush.bf16.msra.mxu0 %v1872
    %2583 = vmatpush.bf16.msra.mxu0 %v1867
    %2584 = vmatpush.bf16.msra.mxu0 %v1862
    %2585 = vmatpush.bf16.msra.mxu0 %v1857
    %2586 = vmatpush.bf16.msra.mxu0 %v1852
    %2587 = vmatpush.bf16.msra.mxu0 %v1847
    %2588 = vmatmul.bf16.gmra.mxu0 %v107
    %v2589 = vpop.f32.mrf.mxu0
    %v2590 = vadd.f32 %v2577, %v2589
    %v2591 = vpop.f32.mrf.mxu0
    %2592 = vdwg.mxu0
    %2593 = vmatpush.bf16.msra.mxu0 %v1922
    %2594 = vmatpush.bf16.msra.mxu0 %v1917
    %2595 = vmatpush.bf16.msra.mxu0 %v1912
    %2596 = vmatpush.bf16.msra.mxu0 %v1907
    %2597 = vmatpush.bf16.msra.mxu0 %v1902
    %2598 = vmatpush.bf16.msra.mxu0 %v1897
    %2599 = vmatpush.bf16.msra.mxu0 %v1892
    %2600 = vmatpush.bf16.msra.mxu0 %v1887
    %2601 = vmatmul.bf16.gmra.mxu0 %v108
    %v2602 = vpop.f32.mrf.mxu0
    %v2603 = vadd.f32 %v2590, %v2602
    %v2604 = vpop.f32.mrf.mxu0
    %2605 = vdwg.mxu0
    %2606 = vmatpush.bf16.msra.mxu0 %v1962
    %2607 = vmatpush.bf16.msra.mxu0 %v1957
    %2608 = vmatpush.bf16.msra.mxu0 %v1952
    %2609 = vmatpush.bf16.msra.mxu0 %v1947
    %2610 = vmatpush.bf16.msra.mxu0 %v1942
    %2611 = vmatpush.bf16.msra.mxu0 %v1937
    %2612 = vmatpush.bf16.msra.mxu0 %v1932
    %2613 = vmatpush.bf16.msra.mxu0 %v1927
    %2614 = vmatmul.bf16.gmra.mxu0 %v109
    %v2615 = vpop.f32.mrf.mxu0
    %v2616 = vadd.f32 %v2603, %v2615
    %v2617 = vpop.f32.mrf.mxu0
    %2618 = vdwg.mxu0
    %2619 = vmatpush.bf16.msra.mxu0 %v2002
    %2620 = vmatpush.bf16.msra.mxu0 %v1997
    %2621 = vmatpush.bf16.msra.mxu0 %v1992
    %2622 = vmatpush.bf16.msra.mxu0 %v1987
    %2623 = vmatpush.bf16.msra.mxu0 %v1982
    %2624 = vmatpush.bf16.msra.mxu0 %v1977
    %2625 = vmatpush.bf16.msra.mxu0 %v1972
    %2626 = vmatpush.bf16.msra.mxu0 %v1967
    %2627 = vmatmul.bf16.gmra.mxu0 %v110
    %v2628 = vpop.f32.mrf.mxu0
    %v2629 = vadd.f32 %v2616, %v2628
    %v2630 = vpop.f32.mrf.mxu0
    %2631 = vdwg.mxu0
    %2632 = vmatpush.bf16.msra.mxu0 0
    %2633 = vmatpush.bf16.msra.mxu0 %v2400
    %2634 = vmatpush.bf16.msra.mxu0 %v2032
    %2635 = vmatpush.bf16.msra.mxu0 %v2027
    %2636 = vmatpush.bf16.msra.mxu0 %v2022
    %2637 = vmatpush.bf16.msra.mxu0 %v2017
    %2638 = vmatpush.bf16.msra.mxu0 %v2012
    %2639 = vmatpush.bf16.msra.mxu0 %v2007
    %2640 = vmatmul.bf16.gmra.mxu0 %v2393
    %v2641 = vpop.f32.mrf.mxu0
    %v2642 = vadd.f32 %v2629, %v2641
    %v2643 = vpop.f32.mrf.mxu0
    %2644 = vdwg.mxu0
    %2645 = vmatpush.bf16.msra.mxu0 %v1723
    %2646 = vmatpush.bf16.msra.mxu0 %v1718
    %2647 = vmatpush.bf16.msra.mxu0 %v1713
    %2648 = vmatpush.bf16.msra.mxu0 %v1708
    %2649 = vmatpush.bf16.msra.mxu0 %v1703
    %2650 = vmatpush.bf16.msra.mxu0 %v1698
    %2651 = vmatpush.bf16.msra.mxu0 %v1693
    %2652 = vmatpush.bf16.msra.mxu0 %v1688
    %2653 = vmatmul.bf16.gmra.mxu0 %v103
    %v2654 = vpop.f32.mrf.mxu0
    %v2655 = vadd.f32 %v542, %v2654
    %v2656 = vpop.f32.mrf.mxu0
    %2657 = vdwg.mxu0
    %2658 = vmatpush.bf16.msra.mxu0 %v1763
    %2659 = vmatpush.bf16.msra.mxu0 %v1758
    %2660 = vmatpush.bf16.msra.mxu0 %v1753
    %2661 = vmatpush.bf16.msra.mxu0 %v1748
    %2662 = vmatpush.bf16.msra.mxu0 %v1743
    %2663 = vmatpush.bf16.msra.mxu0 %v1738
    %2664 = vmatpush.bf16.msra.mxu0 %v1733
    %2665 = vmatpush.bf16.msra.mxu0 %v1728
    %2666 = vmatmul.bf16.gmra.mxu0 %v104
    %v2667 = vpop.f32.mrf.mxu0
    %v2668 = vadd.f32 %v2655, %v2667
    %v2669 = vpop.f32.mrf.mxu0
    %2670 = vdwg.mxu0
    %2671 = vmatpush.bf16.msra.mxu0 %v1803
    %2672 = vmatpush.bf16.msra.mxu0 %v1798
    %2673 = vmatpush.bf16.msra.mxu0 %v1793
    %2674 = vmatpush.bf16.msra.mxu0 %v1788
    %2675 = vmatpush.bf16.msra.mxu0 %v1783
    %2676 = vmatpush.bf16.msra.mxu0 %v1778
    %2677 = vmatpush.bf16.msra.mxu0 %v1773
    %2678 = vmatpush.bf16.msra.mxu0 %v1768
    %2679 = vmatmul.bf16.gmra.mxu0 %v105
    %v2680 = vpop.f32.mrf.mxu0
    %v2681 = vadd.f32 %v2668, %v2680
    %v2682 = vpop.f32.mrf.mxu0
    %2683 = vdwg.mxu0
    %2684 = vmatpush.bf16.msra.mxu0 %v1843
    %2685 = vmatpush.bf16.msra.mxu0 %v1838
    %2686 = vmatpush.bf16.msra.mxu0 %v1833
    %2687 = vmatpush.bf16.msra.mxu0 %v1828
    %2688 = vmatpush.bf16.msra.mxu0 %v1823
    %2689 = vmatpush.bf16.msra.mxu0 %v1818
    %2690 = vmatpush.bf16.msra.mxu0 %v1813
    %2691 = vmatpush.bf16.msra.mxu0 %v1808
    %2692 = vmatmul.bf16.gmra.mxu0 %v106
    %v2693 = vpop.f32.mrf.mxu0
    %v2694 = vadd.f32 %v2681, %v2693
    %v2695 = vpop.f32.mrf.mxu0
    %2696 = vdwg.mxu0
    %2697 = vmatpush.bf16.msra.mxu0 %v1883
    %2698 = vmatpush.bf16.msra.mxu0 %v1878
    %2699 = vmatpush.bf16.msra.mxu0 %v1873
    %2700 = vmatpush.bf16.msra.mxu0 %v1868
    %2701 = vmatpush.bf16.msra.mxu0 %v1863
    %2702 = vmatpush.bf16.msra.mxu0 %v1858
    %2703 = vmatpush.bf16.msra.mxu0 %v1853
    %2704 = vmatpush.bf16.msra.mxu0 %v1848
    %2705 = vmatmul.bf16.gmra.mxu0 %v107
    %v2706 = vpop.f32.mrf.mxu0
    %v2707 = vadd.f32 %v2694, %v2706
    %v2708 = vpop.f32.mrf.mxu0
    %2709 = vdwg.mxu0
    %2710 = vmatpush.bf16.msra.mxu0 %v1923
    %2711 = vmatpush.bf16.msra.mxu0 %v1918
    %2712 = vmatpush.bf16.msra.mxu0 %v1913
    %2713 = vmatpush.bf16.msra.mxu0 %v1908
    %2714 = vmatpush.bf16.msra.mxu0 %v1903
    %2715 = vmatpush.bf16.msra.mxu0 %v1898
    %2716 = vmatpush.bf16.msra.mxu0 %v1893
    %2717 = vmatpush.bf16.msra.mxu0 %v1888
    %2718 = vmatmul.bf16.gmra.mxu0 %v108
    %v2719 = vpop.f32.mrf.mxu0
    %v2720 = vadd.f32 %v2707, %v2719
    %v2721 = vpop.f32.mrf.mxu0
    %2722 = vdwg.mxu0
    %2723 = vmatpush.bf16.msra.mxu0 %v1963
    %2724 = vmatpush.bf16.msra.mxu0 %v1958
    %2725 = vmatpush.bf16.msra.mxu0 %v1953
    %2726 = vmatpush.bf16.msra.mxu0 %v1948
    %2727 = vmatpush.bf16.msra.mxu0 %v1943
    %2728 = vmatpush.bf16.msra.mxu0 %v1938
    %2729 = vmatpush.bf16.msra.mxu0 %v1933
    %2730 = vmatpush.bf16.msra.mxu0 %v1928
    %2731 = vmatmul.bf16.gmra.mxu0 %v109
    %v2732 = vpop.f32.mrf.mxu0
    %v2733 = vadd.f32 %v2720, %v2732
    %v2734 = vpop.f32.mrf.mxu0
    %2735 = vdwg.mxu0
    %2736 = vmatpush.bf16.msra.mxu0 %v2003
    %2737 = vmatpush.bf16.msra.mxu0 %v1998
    %2738 = vmatpush.bf16.msra.mxu0 %v1993
    %2739 = vmatpush.bf16.msra.mxu0 %v1988
    %2740 = vmatpush.bf16.msra.mxu0 %v1983
    %2741 = vmatpush.bf16.msra.mxu0 %v1978
    %2742 = vmatpush.bf16.msra.mxu0 %v1973
    %2743 = vmatpush.bf16.msra.mxu0 %v1968
    %2744 = vmatmul.bf16.gmra.mxu0 %v110
    %v2745 = vpop.f32.mrf.mxu0
    %v2746 = vadd.f32 %v2733, %v2745
    %v2747 = vpop.f32.mrf.mxu0
    %2748 = vdwg.mxu0
    %2749 = vmatpush.bf16.msra.mxu0 0
    %2750 = vmatpush.bf16.msra.mxu0 %v2403
    %2751 = vmatpush.bf16.msra.mxu0 %v2033
    %2752 = vmatpush.bf16.msra.mxu0 %v2028
    %2753 = vmatpush.bf16.msra.mxu0 %v2023
    %2754 = vmatpush.bf16.msra.mxu0 %v2018
    %2755 = vmatpush.bf16.msra.mxu0 %v2013
    %2756 = vmatpush.bf16.msra.mxu0 %v2008
    %2757 = vmatmul.bf16.gmra.mxu0 %v2393
    %v2758 = vpop.f32.mrf.mxu0
    %v2759 = vadd.f32 %v2746, %v2758
    %v2760 = vpop.f32.mrf.mxu0
    %2761 = vdwg.mxu0
    %2762 = vmatpush.bf16.msra.mxu0 %v1724
    %2763 = vmatpush.bf16.msra.mxu0 %v1719
    %2764 = vmatpush.bf16.msra.mxu0 %v1714
    %2765 = vmatpush.bf16.msra.mxu0 %v1709
    %2766 = vmatpush.bf16.msra.mxu0 %v1704
    %2767 = vmatpush.bf16.msra.mxu0 %v1699
    %2768 = vmatpush.bf16.msra.mxu0 %v1694
    %2769 = vmatpush.bf16.msra.mxu0 %v1689
    %2770 = vmatmul.bf16.gmra.mxu0 %v103
    %v2771 = vpop.f32.mrf.mxu0
    %v2772 = vadd.f32 %v543, %v2771
    %v2773 = vpop.f32.mrf.mxu0
    %2774 = vdwg.mxu0
    %2775 = vmatpush.bf16.msra.mxu0 %v1764
    %2776 = vmatpush.bf16.msra.mxu0 %v1759
    %2777 = vmatpush.bf16.msra.mxu0 %v1754
    %2778 = vmatpush.bf16.msra.mxu0 %v1749
    %2779 = vmatpush.bf16.msra.mxu0 %v1744
    %2780 = vmatpush.bf16.msra.mxu0 %v1739
    %2781 = vmatpush.bf16.msra.mxu0 %v1734
    %2782 = vmatpush.bf16.msra.mxu0 %v1729
    %2783 = vmatmul.bf16.gmra.mxu0 %v104
    %v2784 = vpop.f32.mrf.mxu0
    %v2785 = vadd.f32 %v2772, %v2784
    %v2786 = vpop.f32.mrf.mxu0
    %2787 = vdwg.mxu0
    %2788 = vmatpush.bf16.msra.mxu0 %v1804
    %2789 = vmatpush.bf16.msra.mxu0 %v1799
    %2790 = vmatpush.bf16.msra.mxu0 %v1794
    %2791 = vmatpush.bf16.msra.mxu0 %v1789
    %2792 = vmatpush.bf16.msra.mxu0 %v1784
    %2793 = vmatpush.bf16.msra.mxu0 %v1779
    %2794 = vmatpush.bf16.msra.mxu0 %v1774
    %2795 = vmatpush.bf16.msra.mxu0 %v1769
    %2796 = vmatmul.bf16.gmra.mxu0 %v105
    %v2797 = vpop.f32.mrf.mxu0
    %v2798 = vadd.f32 %v2785, %v2797
    %v2799 = vpop.f32.mrf.mxu0
    %2800 = vdwg.mxu0
    %2801 = vmatpush.bf16.msra.mxu0 %v1844
    %2802 = vmatpush.bf16.msra.mxu0 %v1839
    %2803 = vmatpush.bf16.msra.mxu0 %v1834
    %2804 = vmatpush.bf16.msra.mxu0 %v1829
    %2805 = vmatpush.bf16.msra.mxu0 %v1824
    %2806 = vmatpush.bf16.msra.mxu0 %v1819
    %2807 = vmatpush.bf16.msra.mxu0 %v1814
    %2808 = vmatpush.bf16.msra.mxu0 %v1809
    %2809 = vmatmul.bf16.gmra.mxu0 %v106
    %v2810 = vpop.f32.mrf.mxu0
    %v2811 = vadd.f32 %v2798, %v2810
    %v2812 = vpop.f32.mrf.mxu0
    %2813 = vdwg.mxu0
    %2814 = vmatpush.bf16.msra.mxu0 %v1884
    %2815 = vmatpush.bf16.msra.mxu0 %v1879
    %2816 = vmatpush.bf16.msra.mxu0 %v1874
    %2817 = vmatpush.bf16.msra.mxu0 %v1869
    %2818 = vmatpush.bf16.msra.mxu0 %v1864
    %2819 = vmatpush.bf16.msra.mxu0 %v1859
    %2820 = vmatpush.bf16.msra.mxu0 %v1854
    %2821 = vmatpush.bf16.msra.mxu0 %v1849
    %2822 = vmatmul.bf16.gmra.mxu0 %v107
    %v2823 = vpop.f32.mrf.mxu0
    %v2824 = vadd.f32 %v2811, %v2823
    %v2825 = vpop.f32.mrf.mxu0
    %2826 = vdwg.mxu0
    %2827 = vmatpush.bf16.msra.mxu0 %v1924
    %2828 = vmatpush.bf16.msra.mxu0 %v1919
    %2829 = vmatpush.bf16.msra.mxu0 %v1914
    %2830 = vmatpush.bf16.msra.mxu0 %v1909
    %2831 = vmatpush.bf16.msra.mxu0 %v1904
    %2832 = vmatpush.bf16.msra.mxu0 %v1899
    %2833 = vmatpush.bf16.msra.mxu0 %v1894
    %2834 = vmatpush.bf16.msra.mxu0 %v1889
    %2835 = vmatmul.bf16.gmra.mxu0 %v108
    %v2836 = vpop.f32.mrf.mxu0
    %v2837 = vadd.f32 %v2824, %v2836
    %v2838 = vpop.f32.mrf.mxu0
    %2839 = vdwg.mxu0
    %2840 = vmatpush.bf16.msra.mxu0 %v1964
    %2841 = vmatpush.bf16.msra.mxu0 %v1959
    %2842 = vmatpush.bf16.msra.mxu0 %v1954
    %2843 = vmatpush.bf16.msra.mxu0 %v1949
    %2844 = vmatpush.bf16.msra.mxu0 %v1944
    %2845 = vmatpush.bf16.msra.mxu0 %v1939
    %2846 = vmatpush.bf16.msra.mxu0 %v1934
    %2847 = vmatpush.bf16.msra.mxu0 %v1929
    %2848 = vmatmul.bf16.gmra.mxu0 %v109
    %v2849 = vpop.f32.mrf.mxu0
    %v2850 = vadd.f32 %v2837, %v2849
    %v2851 = vpop.f32.mrf.mxu0
    %2852 = vdwg.mxu0
    %2853 = vmatpush.bf16.msra.mxu0 %v2004
    %2854 = vmatpush.bf16.msra.mxu0 %v1999
    %2855 = vmatpush.bf16.msra.mxu0 %v1994
    %2856 = vmatpush.bf16.msra.mxu0 %v1989
    %2857 = vmatpush.bf16.msra.mxu0 %v1984
    %2858 = vmatpush.bf16.msra.mxu0 %v1979
    %2859 = vmatpush.bf16.msra.mxu0 %v1974
    %2860 = vmatpush.bf16.msra.mxu0 %v1969
    %2861 = vmatmul.bf16.gmra.mxu0 %v110
    %v2862 = vpop.f32.mrf.mxu0
    %v2863 = vadd.f32 %v2850, %v2862
    %v2864 = vpop.f32.mrf.mxu0
    %2865 = vdwg.mxu0
    %2866 = vmatpush.bf16.msra.mxu0 0
    %2867 = vmatpush.bf16.msra.mxu0 %v2406
    %2868 = vmatpush.bf16.msra.mxu0 %v2034
    %2869 = vmatpush.bf16.msra.mxu0 %v2029
    %2870 = vmatpush.bf16.msra.mxu0 %v2024
    %2871 = vmatpush.bf16.msra.mxu0 %v2019
    %2872 = vmatpush.bf16.msra.mxu0 %v2014
    %2873 = vmatpush.bf16.msra.mxu0 %v2009
    %2874 = vmatmul.bf16.gmra.mxu0 %v2393
    %v2875 = vpop.f32.mrf.mxu0
    %v2876 = vadd.f32 %v2863, %v2875
    %v2877 = vpop.f32.mrf.mxu0
    %2878 = vdwg.mxu0
    %2879 = vmatpush.bf16.msra.mxu0 %v1725
    %2880 = vmatpush.bf16.msra.mxu0 %v1720
    %2881 = vmatpush.bf16.msra.mxu0 %v1715
    %2882 = vmatpush.bf16.msra.mxu0 %v1710
    %2883 = vmatpush.bf16.msra.mxu0 %v1705
    %2884 = vmatpush.bf16.msra.mxu0 %v1700
    %2885 = vmatpush.bf16.msra.mxu0 %v1695
    %2886 = vmatpush.bf16.msra.mxu0 %v1690
    %2887 = vmatmul.bf16.gmra.mxu0 %v103
    %v2888 = vpop.f32.mrf.mxu0
    %v2889 = vadd.f32 %v544, %v2888
    %v2890 = vpop.f32.mrf.mxu0
    %2891 = vdwg.mxu0
    %2892 = vmatpush.bf16.msra.mxu0 %v1765
    %2893 = vmatpush.bf16.msra.mxu0 %v1760
    %2894 = vmatpush.bf16.msra.mxu0 %v1755
    %2895 = vmatpush.bf16.msra.mxu0 %v1750
    %2896 = vmatpush.bf16.msra.mxu0 %v1745
    %2897 = vmatpush.bf16.msra.mxu0 %v1740
    %2898 = vmatpush.bf16.msra.mxu0 %v1735
    %2899 = vmatpush.bf16.msra.mxu0 %v1730
    %2900 = vmatmul.bf16.gmra.mxu0 %v104
    %v2901 = vpop.f32.mrf.mxu0
    %v2902 = vadd.f32 %v2889, %v2901
    %v2903 = vpop.f32.mrf.mxu0
    %2904 = vdwg.mxu0
    %2905 = vmatpush.bf16.msra.mxu0 %v1805
    %2906 = vmatpush.bf16.msra.mxu0 %v1800
    %2907 = vmatpush.bf16.msra.mxu0 %v1795
    %2908 = vmatpush.bf16.msra.mxu0 %v1790
    %2909 = vmatpush.bf16.msra.mxu0 %v1785
    %2910 = vmatpush.bf16.msra.mxu0 %v1780
    %2911 = vmatpush.bf16.msra.mxu0 %v1775
    %2912 = vmatpush.bf16.msra.mxu0 %v1770
    %2913 = vmatmul.bf16.gmra.mxu0 %v105
    %v2914 = vpop.f32.mrf.mxu0
    %v2915 = vadd.f32 %v2902, %v2914
    %v2916 = vpop.f32.mrf.mxu0
    %2917 = vdwg.mxu0
    %2918 = vmatpush.bf16.msra.mxu0 %v1845
    %2919 = vmatpush.bf16.msra.mxu0 %v1840
    %2920 = vmatpush.bf16.msra.mxu0 %v1835
    %2921 = vmatpush.bf16.msra.mxu0 %v1830
    %2922 = vmatpush.bf16.msra.mxu0 %v1825
    %2923 = vmatpush.bf16.msra.mxu0 %v1820
    %2924 = vmatpush.bf16.msra.mxu0 %v1815
    %2925 = vmatpush.bf16.msra.mxu0 %v1810
    %2926 = vmatmul.bf16.gmra.mxu0 %v106
    %v2927 = vpop.f32.mrf.mxu0
    %v2928 = vadd.f32 %v2915, %v2927
    %v2929 = vpop.f32.mrf.mxu0
    %2930 = vdwg.mxu0
    %2931 = vmatpush.bf16.msra.mxu0 %v1885
    %2932 = vmatpush.bf16.msra.mxu0 %v1880
    %2933 = vmatpush.bf16.msra.mxu0 %v1875
    %2934 = vmatpush.bf16.msra.mxu0 %v1870
    %2935 = vmatpush.bf16.msra.mxu0 %v1865
    %2936 = vmatpush.bf16.msra.mxu0 %v1860
    %2937 = vmatpush.bf16.msra.mxu0 %v1855
    %2938 = vmatpush.bf16.msra.mxu0 %v1850
    %2939 = vmatmul.bf16.gmra.mxu0 %v107
    %v2940 = vpop.f32.mrf.mxu0
    %v2941 = vadd.f32 %v2928, %v2940
    %v2942 = vpop.f32.mrf.mxu0
    %2943 = vdwg.mxu0
    %2944 = vmatpush.bf16.msra.mxu0 %v1925
    %2945 = vmatpush.bf16.msra.mxu0 %v1920
    %2946 = vmatpush.bf16.msra.mxu0 %v1915
    %2947 = vmatpush.bf16.msra.mxu0 %v1910
    %2948 = vmatpush.bf16.msra.mxu0 %v1905
    %2949 = vmatpush.bf16.msra.mxu0 %v1900
    %2950 = vmatpush.bf16.msra.mxu0 %v1895
    %2951 = vmatpush.bf16.msra.mxu0 %v1890
    %2952 = vmatmul.bf16.gmra.mxu0 %v108
    %v2953 = vpop.f32.mrf.mxu0
    %v2954 = vadd.f32 %v2941, %v2953
    %v2955 = vpop.f32.mrf.mxu0
    %2956 = vdwg.mxu0
    %2957 = vmatpush.bf16.msra.mxu0 %v1965
    %2958 = vmatpush.bf16.msra.mxu0 %v1960
    %2959 = vmatpush.bf16.msra.mxu0 %v1955
    %2960 = vmatpush.bf16.msra.mxu0 %v1950
    %2961 = vmatpush.bf16.msra.mxu0 %v1945
    %2962 = vmatpush.bf16.msra.mxu0 %v1940
    %2963 = vmatpush.bf16.msra.mxu0 %v1935
    %2964 = vmatpush.bf16.msra.mxu0 %v1930
    %2965 = vmatmul.bf16.gmra.mxu0 %v109
    %v2966 = vpop.f32.mrf.mxu0
    %v2967 = vadd.f32 %v2954, %v2966
    %v2968 = vpop.f32.mrf.mxu0
    %2969 = vdwg.mxu0
    %2970 = vmatpush.bf16.msra.mxu0 %v2005
    %2971 = vmatpush.bf16.msra.mxu0 %v2000
    %2972 = vmatpush.bf16.msra.mxu0 %v1995
    %2973 = vmatpush.bf16.msra.mxu0 %v1990
    %2974 = vmatpush.bf16.msra.mxu0 %v1985
    %2975 = vmatpush.bf16.msra.mxu0 %v1980
    %2976 = vmatpush.bf16.msra.mxu0 %v1975
    %2977 = vmatpush.bf16.msra.mxu0 %v1970
    %2978 = vmatmul.bf16.gmra.mxu0 %v110
    %v2979 = vpop.f32.mrf.mxu0
    %v2980 = vadd.f32 %v2967, %v2979
    %v2981 = vpop.f32.mrf.mxu0
    %2982 = vdwg.mxu0
    %2983 = vmatpush.bf16.msra.mxu0 0
    %2984 = vmatpush.bf16.msra.mxu0 %v2409
    %2985 = vmatpush.bf16.msra.mxu0 %v2035
    %2986 = vmatpush.bf16.msra.mxu0 %v2030
    %2987 = vmatpush.bf16.msra.mxu0 %v2025
    %2988 = vmatpush.bf16.msra.mxu0 %v2020
    %2989 = vmatpush.bf16.msra.mxu0 %v2015
    %2990 = vmatpush.bf16.msra.mxu0 %v2010
    %2991 = vmatmul.bf16.gmra.mxu0 %v2393
    %v2992 = vpop.f32.mrf.mxu0
    %v2993 = vadd.f32 %v2980, %v2992
    %v2994 = vpop.f32.mrf.mxu0
    %2995 = vdwg.mxu0
    %v2996 = vsub.f32 %v2525, 0.05
    %v2997 = vsub.f32 %v2642, 0.05
    %v2998 = vsub.f32 %v2759, 0.05
    %v2999 = vsub.f32 %v2876, 0.05
    %v3000 = vsub.f32 %v2993, 0.05
    %v3001 = vmax.f32 %v2996, 0.0
    %v3002 = vmax.f32 %v2997, 0.0
    %v3003 = vmax.f32 %v2998, 0.0
    %v3004 = vmax.f32 %v2999, 0.0
    %v3005 = vmax.f32 %v3000, 0.0
    %v3006 = vsub.f32 0.0, %v2525
    %v3007 = vsub.f32 0.0, %v2642
    %v3008 = vsub.f32 0.0, %v2759
    %v3009 = vsub.f32 0.0, %v2876
    %v3010 = vsub.f32 0.0, %v2993
    %v3011 = vsub.f32 %v3006, 0.05
    %v3012 = vsub.f32 %v3007, 0.05
    %v3013 = vsub.f32 %v3008, 0.05
    %v3014 = vsub.f32 %v3009, 0.05
    %v3015 = vsub.f32 %v3010, 0.05
    %v3016 = vmax.f32 %v3011, 0.0
    %v3017 = vmax.f32 %v3012, 0.0
    %v3018 = vmax.f32 %v3013, 0.0
    %v3019 = vmax.f32 %v3014, 0.0
    %v3020 = vmax.f32 %v3015, 0.0
    %v3021 = vsub.f32 %v3001, %v3016
    %v3022 = vsub.f32 %v3002, %v3017
    %v3023 = vsub.f32 %v3003, %v3018
    %v3024 = vsub.f32 %v3004, %v3019
    %v3025 = vsub.f32 %v3005, %v3020
    %v3026 = vmul.f32 %v3021, 0.5
    %v3027 = vmul.f32 %v3022, 0.5
    %v3028 = vmul.f32 %v3023, 0.5
    %v3029 = vmul.f32 %v3024, 0.5
    %v3030 = vmul.f32 %v3025, 0.5
    %v3031 = vpack.c.bf16 %v3026, %v3026
    %v3032 = vpack.c.bf16 %v3027, %v3027
    %v3033 = vpack.c.bf16 %v3028, %v3028
    %v3034 = vpack.c.bf16 %v3029, %v3029
    %v3035 = vpack.c.bf16 %v3030, %v3030
    %v3036 = vld [vmem:[#allocation8] sm:$0xf]
    %v3037 = vld [vmem:[#allocation8 + $0x4] sm:$0xf]
    %v3038 = vld [vmem:[#allocation8 + $0x8] sm:$0xf]
    %v3039 = vld [vmem:[#allocation8 + $0xc] sm:$0xf]
    %v3040 = vld [vmem:[#allocation8 + $0x10] sm:$0xf]
    %v3041 = vld [vmem:[#allocation8 + $0x14] sm:$0xf]
    %v3042 = vld [vmem:[#allocation8 + $0x18] sm:$0xf]
    %v3043 = vld [vmem:[#allocation8 + $0x1c] sm:$0xf]
    %v3044 = vld [vmem:[#allocation8 + $0x20] sm:$0xf]
    %v3045 = vld [vmem:[#allocation8 + $0x24] sm:$0xf]
    %v3046 = vld [vmem:[#allocation8 + $0x28] sm:$0xf]
    %v3047 = vld [vmem:[#allocation8 + $0x2c] sm:$0xf]
    %v3048 = vld [vmem:[#allocation8 + $0x30] sm:$0xf]
    %v3049 = vld [vmem:[#allocation8 + $0x34] sm:$0xf]
    %v3050 = vld [vmem:[#allocation8 + $0x38] sm:$0xf]
    %v3051 = vld [vmem:[#allocation8 + $0x3c] sm:$0xf]
    %v3052 = vld [vmem:[#allocation8 + $0x40] sm:$0xf]
    %v3053 = vld [vmem:[#allocation8 + $0x44] sm:$0xf]
    %v3054 = vld [vmem:[#allocation8 + $0x48] sm:$0xf]
    %v3055 = vld [vmem:[#allocation8 + $0x4c] sm:$0xf]
    %v3056 = vld [vmem:[#allocation8 + $0x50] sm:$0xf]
    %v3057 = vld [vmem:[#allocation8 + $0x54] sm:$0xf]
    %v3058 = vld [vmem:[#allocation8 + $0x58] sm:$0xf]
    %v3059 = vld [vmem:[#allocation8 + $0x5c] sm:$0xf]
    %v3060 = vld [vmem:[#allocation8 + $0x60] sm:$0xf]
    %v3061 = vld [vmem:[#allocation8 + $0x64] sm:$0xf]
    %v3062 = vld [vmem:[#allocation8 + $0x68] sm:$0xf]
    %v3063 = vld [vmem:[#allocation8 + $0x6c] sm:$0xf]
    %v3064 = vld [vmem:[#allocation8 + $0x70] sm:$0xf]
    %v3065 = vld [vmem:[#allocation8 + $0x74] sm:$0xf]
    %v3066 = vld [vmem:[#allocation8 + $0x78] sm:$0xf]
    %v3067 = vld [vmem:[#allocation8 + $0x7c] sm:$0xf]
    %v3068 = vld [vmem:[#allocation8 + $0x80] sm:$0xf]
    %v3069 = vld [vmem:[#allocation8 + $0x84] sm:$0xf]
    %v3070 = vld [vmem:[#allocation8 + $0x88] sm:$0xf]
    %v3071 = vld [vmem:[#allocation8 + $0x8c] sm:$0xf]
    %v3072 = vld [vmem:[#allocation8 + $0x90] sm:$0xf]
    %v3073 = vld [vmem:[#allocation8 + $0x94] sm:$0xf]
    %v3074 = vld [vmem:[#allocation8 + $0x98] sm:$0xf]
    %v3075 = vld [vmem:[#allocation8 + $0x9c] sm:$0xf]
    %v3076 = vld [vmem:[#allocation8 + $0xa0] sm:$0xf]
    %v3077 = vld [vmem:[#allocation8 + $0xa4] sm:$0xf]
    %v3078 = vld [vmem:[#allocation8 + $0xa8] sm:$0xf]
    %v3079 = vld [vmem:[#allocation8 + $0xac] sm:$0xf]
    %v3080 = vld [vmem:[#allocation8 + $0xb0] sm:$0xf]
    %v3081 = vld [vmem:[#allocation8 + $0xb4] sm:$0xf]
    %v3082 = vld [vmem:[#allocation8 + $0xb8] sm:$0xf]
    %v3083 = vld [vmem:[#allocation8 + $0xbc] sm:$0xf]
    %v3084 = vld [vmem:[#allocation8 + $0xc0] sm:$0xf]
    %v3085 = vld [vmem:[#allocation8 + $0xc4] sm:$0xf]
    %v3086 = vld [vmem:[#allocation8 + $0xc8] sm:$0xf]
    %v3087 = vld [vmem:[#allocation8 + $0xcc] sm:$0xf]
    %v3088 = vld [vmem:[#allocation8 + $0xd0] sm:$0xf]
    %v3089 = vld [vmem:[#allocation8 + $0xd4] sm:$0xf]
    %v3090 = vld [vmem:[#allocation8 + $0xd8] sm:$0xf]
    %v3091 = vld [vmem:[#allocation8 + $0xdc] sm:$0xf]
    %v3092 = vld [vmem:[#allocation8 + $0xe0] sm:$0xf]
    %v3093 = vld [vmem:[#allocation8 + $0xe4] sm:$0xf]
    %v3094 = vld [vmem:[#allocation8 + $0xe8] sm:$0xf]
    %v3095 = vld [vmem:[#allocation8 + $0xec] sm:$0xf]
    %v3096 = vld [vmem:[#allocation8 + $0xf0] sm:$0xf]
    %v3097 = vld [vmem:[#allocation8 + $0xf4] sm:$0xf]
    %v3098 = vld [vmem:[#allocation8 + $0xf8] sm:$0xf]
    %v3099 = vld [vmem:[#allocation8 + $0xfc] sm:$0xf]
    %v3100 = vld [vmem:[#allocation8 + $0x100] sm:$0xf]
    %v3101 = vld [vmem:[#allocation8 + $0x104] sm:$0xf]
    %v3102 = vld [vmem:[#allocation8 + $0x108] sm:$0xf]
    %v3103 = vld [vmem:[#allocation8 + $0x10c] sm:$0xf]
    %v3104 = vld [vmem:[#allocation8 + $0x110] sm:$0xf]
    %v3105 = vld [vmem:[#allocation8 + $0x114] sm:$0xf]
    %v3106 = vld [vmem:[#allocation8 + $0x118] sm:$0xf]
    %v3107 = vld [vmem:[#allocation8 + $0x11c] sm:$0xf]
    %v3108 = vld [vmem:[#allocation8 + $0x120] sm:$0xf]
    %v3109 = vld [vmem:[#allocation8 + $0x124] sm:$0xf]
    %v3110 = vld [vmem:[#allocation8 + $0x128] sm:$0xf]
    %v3111 = vld [vmem:[#allocation8 + $0x12c] sm:$0xf]
    %v3112 = vld [vmem:[#allocation8 + $0x130] sm:$0xf]
    %v3113 = vld [vmem:[#allocation8 + $0x134] sm:$0xf]
    %v3114 = vld [vmem:[#allocation8 + $0x138] sm:$0xf]
    %v3115 = vld [vmem:[#allocation8 + $0x13c] sm:$0xf]
    %v3116 = vld [vmem:[#allocation10] sm:$0x1]
    %v3118 = vperm.slane %v3116, 0
    %v3200 = vunpack.c.l.b16 %v3036
    %v3201 = vunpack.c.l.b16 %v3037
    %v3202 = vunpack.c.l.b16 %v3038
    %v3203 = vunpack.c.l.b16 %v3039
    %v3204 = vunpack.c.l.b16 %v3040
    %v3205 = vunpack.c.l.b16 %v3041
    %v3206 = vunpack.c.l.b16 %v3042
    %v3207 = vunpack.c.l.b16 %v3043
    %v3208 = vunpack.c.l.b16 %v3044
    %v3209 = vunpack.c.l.b16 %v3045
    %v3210 = vunpack.c.l.b16 %v3046
    %v3211 = vunpack.c.l.b16 %v3047
    %v3212 = vunpack.c.l.b16 %v3048
    %v3213 = vunpack.c.l.b16 %v3049
    %v3214 = vunpack.c.l.b16 %v3050
    %v3215 = vunpack.c.l.b16 %v3051
    %v3216 = vunpack.c.l.b16 %v3052
    %v3217 = vunpack.c.l.b16 %v3053
    %v3218 = vunpack.c.l.b16 %v3054
    %v3219 = vunpack.c.l.b16 %v3055
    %v3220 = vunpack.c.l.b16 %v3056
    %v3221 = vunpack.c.l.b16 %v3057
    %v3222 = vunpack.c.l.b16 %v3058
    %v3223 = vunpack.c.l.b16 %v3059
    %v3224 = vunpack.c.l.b16 %v3060
    %v3225 = vunpack.c.l.b16 %v3061
    %v3226 = vunpack.c.l.b16 %v3062
    %v3227 = vunpack.c.l.b16 %v3063
    %v3228 = vunpack.c.l.b16 %v3064
    %v3229 = vunpack.c.l.b16 %v3065
    %v3230 = vunpack.c.l.b16 %v3066
    %v3231 = vunpack.c.l.b16 %v3067
    %v3232 = vunpack.c.l.b16 %v3068
    %v3233 = vunpack.c.l.b16 %v3069
    %v3234 = vunpack.c.l.b16 %v3070
    %v3235 = vunpack.c.l.b16 %v3071
    %v3236 = vunpack.c.l.b16 %v3072
    %v3237 = vunpack.c.l.b16 %v3073
    %v3238 = vunpack.c.l.b16 %v3074
    %v3239 = vunpack.c.l.b16 %v3075
    %v3240 = vunpack.c.l.b16 %v3076
    %v3241 = vunpack.c.l.b16 %v3077
    %v3242 = vunpack.c.l.b16 %v3078
    %v3243 = vunpack.c.l.b16 %v3079
    %v3244 = vunpack.c.l.b16 %v3080
    %v3245 = vunpack.c.l.b16 %v3081
    %v3246 = vunpack.c.l.b16 %v3082
    %v3247 = vunpack.c.l.b16 %v3083
    %v3248 = vunpack.c.l.b16 %v3084
    %v3249 = vunpack.c.l.b16 %v3085
    %v3250 = vunpack.c.l.b16 %v3086
    %v3251 = vunpack.c.l.b16 %v3087
    %v3252 = vunpack.c.l.b16 %v3088
    %v3253 = vunpack.c.l.b16 %v3089
    %v3254 = vunpack.c.l.b16 %v3090
    %v3255 = vunpack.c.l.b16 %v3091
    %v3256 = vunpack.c.l.b16 %v3092
    %v3257 = vunpack.c.l.b16 %v3093
    %v3258 = vunpack.c.l.b16 %v3094
    %v3259 = vunpack.c.l.b16 %v3095
    %v3260 = vunpack.c.l.b16 %v3096
    %v3261 = vunpack.c.l.b16 %v3097
    %v3262 = vunpack.c.l.b16 %v3098
    %v3263 = vunpack.c.l.b16 %v3099
    %v3264 = vunpack.c.l.b16 %v3100
    %v3265 = vunpack.c.l.b16 %v3101
    %v3266 = vunpack.c.l.b16 %v3102
    %v3267 = vunpack.c.l.b16 %v3103
    %v3268 = vunpack.c.l.b16 %v3104
    %v3269 = vunpack.c.l.b16 %v3105
    %v3270 = vunpack.c.l.b16 %v3106
    %v3271 = vunpack.c.l.b16 %v3107
    %v3272 = vunpack.c.l.b16 %v3108
    %v3273 = vunpack.c.l.b16 %v3109
    %v3274 = vunpack.c.l.b16 %v3110
    %v3275 = vunpack.c.l.b16 %v3111
    %v3276 = vunpack.c.l.b16 %v3112
    %v3277 = vunpack.c.l.b16 %v3113
    %v3278 = vunpack.c.l.b16 %v3114
    %v3279 = vunpack.c.l.b16 %v3115
    %v3280 = vpack.c.b16 %v3201, %v3200
    %v3281 = vpack.c.b16 %v3203, %v3202
    %v3282 = vpack.c.b16 %v3205, %v3204
    %v3283 = vpack.c.b16 %v3207, %v3206
    %v3284 = vpack.c.b16 %v3209, %v3208
    %v3285 = vpack.c.b16 %v3211, %v3210
    %v3286 = vpack.c.b16 %v3213, %v3212
    %v3287 = vpack.c.b16 %v3215, %v3214
    %v3288 = vpack.c.b16 %v3217, %v3216
    %v3289 = vpack.c.b16 %v3219, %v3218
    %v3290 = vpack.c.b16 %v3221, %v3220
    %v3291 = vpack.c.b16 %v3223, %v3222
    %v3292 = vpack.c.b16 %v3225, %v3224
    %v3293 = vpack.c.b16 %v3227, %v3226
    %v3294 = vpack.c.b16 %v3229, %v3228
    %v3295 = vpack.c.b16 %v3231, %v3230
    %v3296 = vpack.c.b16 %v3233, %v3232
    %v3297 = vpack.c.b16 %v3235, %v3234
    %v3298 = vpack.c.b16 %v3237, %v3236
    %v3299 = vpack.c.b16 %v3239, %v3238
    %v3300 = vpack.c.b16 %v3241, %v3240
    %v3301 = vpack.c.b16 %v3243, %v3242
    %v3302 = vpack.c.b16 %v3245, %v3244
    %v3303 = vpack.c.b16 %v3247, %v3246
    %v3304 = vpack.c.b16 %v3249, %v3248
    %v3305 = vpack.c.b16 %v3251, %v3250
    %v3306 = vpack.c.b16 %v3253, %v3252
    %v3307 = vpack.c.b16 %v3255, %v3254
    %v3308 = vpack.c.b16 %v3257, %v3256
    %v3309 = vpack.c.b16 %v3259, %v3258
    %v3310 = vpack.c.b16 %v3261, %v3260
    %v3311 = vpack.c.b16 %v3263, %v3262
    %v3312 = vpack.c.b16 %v3265, %v3264
    %v3313 = vpack.c.b16 %v3267, %v3266
    %v3314 = vpack.c.b16 %v3269, %v3268
    %v3315 = vpack.c.b16 %v3271, %v3270
    %v3316 = vpack.c.b16 %v3273, %v3272
    %v3317 = vpack.c.b16 %v3275, %v3274
    %v3318 = vpack.c.b16 %v3277, %v3276
    %v3319 = vpack.c.b16 %v3279, %v3278
    %3360 = vmatpush.bf16.msra.mxu0 %v3287
    %3361 = vmatpush.bf16.msra.mxu0 %v3286
    %3362 = vmatpush.bf16.msra.mxu0 %v3285
    %3363 = vmatpush.bf16.msra.mxu0 %v3284
    %3364 = vmatpush.bf16.msra.mxu0 %v3283
    %3365 = vmatpush.bf16.msra.mxu0 %v3282
    %3366 = vmatpush.bf16.msra.mxu0 %v3281
    %3367 = vmatpush.bf16.msra.mxu0 %v3280
    %3368 = vmatmul.bf16.gmra.mxu0 %v3031
    %v3369 = vpop.f32.mrf.mxu0
    %v3370 = vadd.f32 %v3118, %v3369
    %v3371 = vpop.f32.mrf.mxu0
    %3372 = vdwg.mxu0
    %3373 = vmatpush.bf16.msra.mxu0 %v3295
    %3374 = vmatpush.bf16.msra.mxu0 %v3294
    %3375 = vmatpush.bf16.msra.mxu0 %v3293
    %3376 = vmatpush.bf16.msra.mxu0 %v3292
    %3377 = vmatpush.bf16.msra.mxu0 %v3291
    %3378 = vmatpush.bf16.msra.mxu0 %v3290
    %3379 = vmatpush.bf16.msra.mxu0 %v3289
    %3380 = vmatpush.bf16.msra.mxu0 %v3288
    %3381 = vmatmul.bf16.gmra.mxu0 %v3032
    %v3382 = vpop.f32.mrf.mxu0
    %v3383 = vadd.f32 %v3370, %v3382
    %v3384 = vpop.f32.mrf.mxu0
    %3385 = vdwg.mxu0
    %3386 = vmatpush.bf16.msra.mxu0 %v3303
    %3387 = vmatpush.bf16.msra.mxu0 %v3302
    %3388 = vmatpush.bf16.msra.mxu0 %v3301
    %3389 = vmatpush.bf16.msra.mxu0 %v3300
    %3390 = vmatpush.bf16.msra.mxu0 %v3299
    %3391 = vmatpush.bf16.msra.mxu0 %v3298
    %3392 = vmatpush.bf16.msra.mxu0 %v3297
    %3393 = vmatpush.bf16.msra.mxu0 %v3296
    %3394 = vmatmul.bf16.gmra.mxu0 %v3033
    %v3395 = vpop.f32.mrf.mxu0
    %v3396 = vadd.f32 %v3383, %v3395
    %v3397 = vpop.f32.mrf.mxu0
    %3398 = vdwg.mxu0
    %3399 = vmatpush.bf16.msra.mxu0 %v3311
    %3400 = vmatpush.bf16.msra.mxu0 %v3310
    %3401 = vmatpush.bf16.msra.mxu0 %v3309
    %3402 = vmatpush.bf16.msra.mxu0 %v3308
    %3403 = vmatpush.bf16.msra.mxu0 %v3307
    %3404 = vmatpush.bf16.msra.mxu0 %v3306
    %3405 = vmatpush.bf16.msra.mxu0 %v3305
    %3406 = vmatpush.bf16.msra.mxu0 %v3304
    %3407 = vmatmul.bf16.gmra.mxu0 %v3034
    %v3408 = vpop.f32.mrf.mxu0
    %v3409 = vadd.f32 %v3396, %v3408
    %v3410 = vpop.f32.mrf.mxu0
    %3411 = vdwg.mxu0
    %3412 = vmatpush.bf16.msra.mxu0 %v3319
    %3413 = vmatpush.bf16.msra.mxu0 %v3318
    %3414 = vmatpush.bf16.msra.mxu0 %v3317
    %3415 = vmatpush.bf16.msra.mxu0 %v3316
    %3416 = vmatpush.bf16.msra.mxu0 %v3315
    %3417 = vmatpush.bf16.msra.mxu0 %v3314
    %3418 = vmatpush.bf16.msra.mxu0 %v3313
    %3419 = vmatpush.bf16.msra.mxu0 %v3312
    %3420 = vmatmul.bf16.gmra.mxu0 %v3035
    %v3421 = vpop.f32.mrf.mxu0
    %v3422 = vadd.f32 %v3409, %v3421
    %v3423 = vpop.f32.mrf.mxu0
    %3424 = vdwg.mxu0
    %3425 = vmax.xlane.f32.xlu0 %v3422
    %v3426 = vpop.xlane.xlu0 %3425
    %v3427 = vsub.f32 %v3422, %v3426
    %v3428 = vmul.f32 %v3427, 1.442695
    %v3429 = vpow.pop %v3428
    %3430 = vadd.xlane.f32.xlu0 %v3429
    %v3431 = vpop.xlane.xlu0 %3430
    %v3432 = vlog2.pop %v3431
    %v3433 = vmul.f32 %v3432, 0.6931472
    %v3434 = vsub.f32 %v3427, %v3433
    %3435 = vst [vmem:[#allocation11] sm:$0xff] %v3434
    // Predicated region
    $region42: #{adlnet_forward.1} parent=1 // pred_check
      _
    $region43: #{adlnet_forward.1} parent=1 // pred_check_branch
      %3437 = sbr.rel (0) target = $region45
    $region44: #{adlnet_forward.1} parent=1 // pred_region
      %3439 = vsyncadd [#allocation4], 0
      %s3441 = sshll.u32 [#allocation11], 4
      %s3442 = int_to_ptr.vmem [resolvable:$true] %s3441
      %s3443 = sshll.u32 %s5, 4
      %s3444 = int_to_ptr.hbm [resolvable:$true] %s3443
      %3446 = dma.vmem_to_hbm [thread:$0]  %s3442, 128, %s3444, [#allocation4]
    $region45: #{adlnet_forward.1} parent=1 // pred_fallthru
      _
    // Predicated region
    $region46: #{adlnet_forward.1} parent=1 // pred_check
      _
    $region47: #{adlnet_forward.1} parent=1 // pred_check_branch
      %3448 = sbr.rel (0) target = $region49
    $region48: #{adlnet_forward.1} parent=1 // pred_region
      %3450 = dma.done [#allocation4], 128
    $region49: #{adlnet_forward.1} parent=1 // pred_fallthru
      _
    %3451 = vsyncpa [#allocation3], 1
    %3452 = vsyncpa [#allocation6], 1
    %3453 = vsyncpa [#allocation9], 1
    %3454 = vsyncpa [#allocation4], 1

</llo_original>
